<compile_context>
chip_gen: v6e
topology: v6e:2x2x1
jax: 0.10.0
libtpu: 0.0.40
codegen_flags: <defaults>
</compile_context>

<pallas_src>
import jax
import jax.numpy as jnp
from jax import lax
from jax.experimental import pallas as pl
from jax.experimental.pallas import tpu as pltpu


HP = 128  # padded lane width for features / hidden state

_VMEM = pl.BlockSpec(memory_space=pltpu.MemorySpace.VMEM)


# ----------------------------- fused Pallas kernel ---------------------------

def make_decoder_kernel(seq_len, num_layers, hidden_dims):
    """hidden_dims[l] = real hidden size of LSTM layer l (<= HP)."""
    T = seq_len

    def kernel(*refs):
        x_ref = refs[0]                                  # (T, HP) bf16
        lstm_refs = refs[1:1 + 3 * num_layers]           # (wih, whh, b) per layer
        wout_ref = refs[1 + 3 * num_layers]              # (HP, HP) bf16
        bout_ref = refs[2 + 3 * num_layers]              # (1, HP) f32
        o_ref = refs[3 + 3 * num_layers]                 # (T, HP) f32

        lane = lax.broadcasted_iota(jnp.int32, (1, HP), 1)

        lhs = x_ref[...]                                 # bf16 matmul LHS
        h = jnp.zeros((1, HP), jnp.float32)
        c = jnp.zeros((1, HP), jnp.float32)

        for l in range(num_layers):
            H = hidden_dims[l]
            nb = 2 if H <= HP // 2 else 4                # gate blocks in packed layout
            wih_ref = lstm_refs[3 * l + 0]               # (HP, nb*HP) bf16
            whh_ref = lstm_refs[3 * l + 1]               # (HP, nb*HP) bf16
            b_ref = lstm_refs[3 * l + 2]                 # (1, nb*HP) f32

            # Input projection for all time steps at once (one MXU matmul);
            # kept as a value -- no VMEM scratch round trip.
            xw = jnp.dot(lhs, wih_ref[...],
                         preferred_element_type=jnp.float32) + b_ref[...]

            ys = []
            # Fully unrolled recurrence (T is small and static).
            for t in range(T):
                gates = xw[t:t + 1, :] + jnp.dot(
                    h.astype(jnp.bfloat16), whh_ref[...],
                    preferred_element_type=jnp.float32)
                if nb == 2:
                    # Packed layout: block0 = [i | f], block1 = [g | o]
                    # (each gate's H real lanes start at offsets 0 / 64).
                    blk_if = gates[:, 0:HP]
                    blk_go = gates[:, HP:2 * HP]
                    s_if = jax.nn.sigmoid(blk_if)        # [sig(i) | sig(f)]
                    t_go = jnp.tanh(blk_go)              # [tanh(g) | .]
                    s_go = jax.nn.sigmoid(blk_go)        # [. | sig(o)]
                    i_g = s_if
                    f_g = pltpu.roll(s_if, HP // 2, axis=1)   # sig(f) -> lanes 0:H
                    g_g = t_go
                    o_g = pltpu.roll(s_go, HP // 2, axis=1)   # sig(o) -> lanes 0:H
                else:
                    # One 128-lane block per gate (H > 64).
                    i_g = jax.nn.sigmoid(gates[:, 0 * HP:1 * HP])
                    f_g = jax.nn.sigmoid(gates[:, 1 * HP:2 * HP])
                    g_g = jnp.tanh(gates[:, 2 * HP:3 * HP])
                    o_g = jax.nn.sigmoid(gates[:, 3 * HP:4 * HP])
                c = f_g * c + i_g * g_g
                h = o_g * jnp.tanh(c)
                # Sequence output gets ReLU (PyTorch: x = relu(x) per layer);
                # hidden_n (h) stays un-ReLU'd, as in the PyTorch module.
                ys.append(jnp.maximum(h, 0.0))
            cur = jnp.concatenate(ys, axis=0)            # (T, HP) f32, VMEM-resident
            lhs = cur.astype(jnp.bfloat16)

            # Inter-layer hand-off: h0 = hidden_n[:, :H//2], c0 back to zeros.
            if l + 1 < num_layers:
                h_next = hidden_dims[l + 1]
                h = jnp.where(lane < h_next, h, 0.0)
                c = jnp.zeros((1, HP), jnp.float32)

        # Final output layer: single lane-dense (T, HP) store.
        o_ref[...] = (
            jnp.dot(lhs, wout_ref[...], preferred_element_type=jnp.float32)
            + bout_ref[...]
        )

    return kernel


# ------------------------------ param handling --------------------------------

def init_decoder_params(key, input_dim, n_features, num_layers):
    """Deterministic params mirroring Decoder.__init__ shapes (transposed)."""
    params = {"lstm": []}
    hidden = input_dim * 2
    in_dim = input_dim
    for i in range(num_layers):
        if i > 0:
            in_dim = hidden
            hidden = hidden // 2
        k1, k2, k3, k4, key = jax.random.split(key, 5)
        s = 1.0 / jnp.sqrt(hidden)
        params["lstm"].append(dict(
            wih_t=jax.random.uniform(k1, (in_dim, 4 * hidden), jnp.float32, -s, s),
            whh_t=jax.random.uniform(k2, (hidden, 4 * hidden), jnp.float32, -s, s),
            b=(jax.random.uniform(k3, (1, 4 * hidden), jnp.float32, -s, s)
               + jax.random.uniform(k4, (1, 4 * hidden), jnp.float32, -s, s)),
        ))
    k1, k2, key = jax.random.split(key, 3)
    s = 1.0 / jnp.sqrt(hidden)
    params["w_out_t"] = jax.random.uniform(k1, (hidden, n_features), jnp.float32, -s, s)
    params["b_out"] = jax.random.uniform(k2, (1, n_features), jnp.float32, -s, s)
    return params


def _gate_starts(H):
    """Column start of each gate (i, f, g, o) in the packed layout."""
    if H <= HP // 2:
        return 2, [0, HP // 2, HP, HP + HP // 2]       # [i|f], [g|o]
    return 4, [0, HP, 2 * HP, 3 * HP]                  # one block per gate


def _pack_gates(w, H, dtype):
    """(rows, 4H) -> (rows, nb*HP) with each gate's H columns at its packed slot."""
    nb, starts = _gate_starts(H)
    out = jnp.zeros((w.shape[0], nb * HP), dtype)
    for g in range(4):
        out = out.at[:, starts[g]:starts[g] + H].set(
            w[:, g * H:(g + 1) * H].astype(dtype))
    return out


def _pad_rows(w):
    return jnp.pad(w, ((0, HP - w.shape[0]), (0, 0)))


def pack_params_padded(params, input_dim, n_features, num_layers):
    """bf16 weights, f32 biases, tight gate packing; called once at build time."""
    flat, hidden_dims = [], []
    hidden = input_dim * 2
    in_dim = input_dim
    for i in range(num_layers):
        if i > 0:
            in_dim = hidden
            hidden = hidden // 2
        assert in_dim <= HP and hidden <= HP
        hidden_dims.append(hidden)
        lp = params["lstm"][i]
        flat += [
            _pad_rows(_pack_gates(lp["wih_t"], hidden, jnp.bfloat16)),  # (HP, nb*HP)
            _pad_rows(_pack_gates(lp["whh_t"], hidden, jnp.bfloat16)),  # (HP, nb*HP)
            _pack_gates(lp["b"], hidden, jnp.float32),                  # (1, nb*HP)
        ]
    assert n_features <= HP
    w_out = jnp.pad(params["w_out_t"].astype(jnp.bfloat16),
                    ((0, HP - params["w_out_t"].shape[0]),
                     (0, HP - n_features)))                             # (HP, HP)
    b_out = jnp.pad(params["b_out"], ((0, 0), (0, HP - n_features)))    # (1, HP)
    flat += [w_out, b_out]
    return flat, hidden_dims


# --------------------------------- wrapper ------------------------------------

def build_decoder(params, seq_len, input_dim, n_features, num_layers):
    """Packs params once; returns a jitted x -> (1, seq_len, n_features) fn."""
    flat, hidden_dims = pack_params_padded(params, input_dim, n_features, num_layers)
    kernel = make_decoder_kernel(seq_len, num_layers, hidden_dims)
    call = pl.pallas_call(
        kernel,
        out_shape=jax.ShapeDtypeStruct((seq_len, HP), jnp.float32),
        in_specs=[_VMEM] * (1 + len(flat)),
        out_specs=_VMEM,
    )

    @jax.jit
    def forward(x, *flat_params):
        x_pad = jnp.pad(x, ((0, 0), (0, HP - x.shape[1]))).astype(jnp.bfloat16)
        out_pad = call(x_pad, *flat_params)
        # Undo lane padding and re-add the leading batch dim (x.unsqueeze(0)).
        return out_pad[:, :n_features][None]

    return lambda x: forward(x, *flat)


# ----------------------------- pure-JAX reference ------------------------------

def _ref_forward(x, params, input_dim, num_layers):
    """Mirrors the kernel's numerics (bf16 matmul operands, f32 accum/gates)."""
    cur = x.astype(jnp.bfloat16)
    h0 = jnp.zeros((1, input_dim * 2), jnp.float32)
    c0 = jnp.zeros((1, input_dim * 2), jnp.float32)
    for i in range(num_layers):
        lp = params["lstm"][i]
        H = lp["whh_t"].shape[0]
        wih = lp["wih_t"].astype(jnp.bfloat16)
        whh = lp["whh_t"].astype(jnp.bfloat16)
        xw = jnp.dot(cur, wih, preferred_element_type=jnp.float32) + lp["b"]
        h, c = h0, c0
        ys = []
        for t in range(cur.shape[0]):
            g = xw[t:t + 1] + jnp.dot(h.astype(jnp.bfloat16), whh,
                                      preferred_element_type=jnp.float32)
            i_g = jax.nn.sigmoid(g[:, :H])
            f_g = jax.nn.sigmoid(g[:, H:2 * H])
            g_g = jnp.tanh(g[:, 2 * H:3 * H])
            o_g = jax.nn.sigmoid(g[:, 3 * H:])
            c = f_g * c + i_g * g_g
            h = o_g * jnp.tanh(c)
            ys.append(jnp.maximum(h, 0.0))
        cur = jnp.concatenate(ys, axis=0).astype(jnp.bfloat16)
        h0 = h[:, :H // 2]
        c0 = jnp.zeros((1, H // 2), jnp.float32)
    out = jnp.dot(cur, params["w_out_t"].astype(jnp.bfloat16),
                  preferred_element_type=jnp.float32) + params["b_out"]
    return out[None]


# ----------------------------------- main --------------------------------------

if __name__ == "__main__":
    seq_len, input_dim, n_features, num_layers, dropout = 8, 32, 4, 2, 0.0

    key = jax.random.PRNGKey(0)
    kx, kp = jax.random.split(key)
    x = jax.random.normal(kx, (seq_len, input_dim), jnp.float32)
    params = init_decoder_params(kp, input_dim, n_features, num_layers)

    decoder = build_decoder(params, seq_len, input_dim, n_features, num_layers)
    out = jax.block_until_ready(decoder(x))

    ref = _ref_forward(x, params, input_dim, num_layers)
    assert out.shape == (1, seq_len, n_features), out.shape
    err = float(jnp.max(jnp.abs(out - ref)))
    assert jnp.allclose(out, ref, rtol=2e-3, atol=2e-3), f"mismatch vs reference (max abs err {err})"

    print("KERNEL_OK")
</pallas_src>

<mosaic_0001>
module attributes {stable_mosaic.version = 11 : i64} {
  func.func @kernel(%arg0: memref<8x128xbf16, #tpu.memory_space<vmem>>, %arg1: memref<128x256xbf16, #tpu.memory_space<vmem>>, %arg2: memref<128x256xbf16, #tpu.memory_space<vmem>>, %arg3: memref<1x256xf32, #tpu.memory_space<vmem>>, %arg4: memref<128x256xbf16, #tpu.memory_space<vmem>>, %arg5: memref<128x256xbf16, #tpu.memory_space<vmem>>, %arg6: memref<1x256xf32, #tpu.memory_space<vmem>>, %arg7: memref<128x128xbf16, #tpu.memory_space<vmem>>, %arg8: memref<1x128xf32, #tpu.memory_space<vmem>>, %arg9: memref<8x128xf32, #tpu.memory_space<vmem>>) attributes {dimension_semantics = [], scalar_prefetch = 0 : i64, scratch_operands = 0 : i64, tpu.core_type = #tpu.core_type<tc>} {
    %0 = tpu.iota {dimensions = array<i32: 1>} : vector<1x128xi32>
    %c0 = arith.constant 0 : index
    %c0_0 = arith.constant 0 : index
    %1 = vector.load %arg0[%c0, %c0_0] : memref<8x128xbf16, #tpu.memory_space<vmem>>, vector<8x128xbf16>
    %cst = arith.constant 0.000000e+00 : f32
    %2 = vector.broadcast %cst : f32 to vector<1x128xf32>
    %cst_1 = arith.constant 0.000000e+00 : f32
    %3 = vector.broadcast %cst_1 : f32 to vector<1x128xf32>
    %c0_2 = arith.constant 0 : index
    %c0_3 = arith.constant 0 : index
    %4 = vector.load %arg1[%c0_2, %c0_3] : memref<128x256xbf16, #tpu.memory_space<vmem>>, vector<128x256xbf16>
    %cst_4 = arith.constant dense<0.000000e+00> : vector<8x256xf32>
    %5 = tpu.matmul %1, %4, %cst_4 {dimension_numbers = #tpu.dot_dimension_numbers<[1], [0], [0], [1], [0, 0, 1, 1], [], []>} : vector<8x128xbf16>, vector<128x256xbf16>, vector<8x256xf32> -> vector<8x256xf32>
    %c0_5 = arith.constant 0 : index
    %c0_6 = arith.constant 0 : index
    %6 = vector.load %arg3[%c0_5, %c0_6] : memref<1x256xf32, #tpu.memory_space<vmem>>, vector<1x256xf32>
    %7 = vector.broadcast %6 : vector<1x256xf32> to vector<8x256xf32>
    %8 = arith.addf %5, %7 : vector<8x256xf32>
    %9 = vector.extract_strided_slice %8 {offsets = [0, 0], sizes = [1, 256], strides = [1, 1]} : vector<8x256xf32> to vector<1x256xf32>
    %10 = arith.truncf %2 : vector<1x128xf32> to vector<1x128xbf16>
    %c0_7 = arith.constant 0 : index
    %c0_8 = arith.constant 0 : index
    %11 = vector.load %arg2[%c0_7, %c0_8] : memref<128x256xbf16, #tpu.memory_space<vmem>>, vector<128x256xbf16>
    %cst_9 = arith.constant dense<0.000000e+00> : vector<1x256xf32>
    %12 = tpu.matmul %10, %11, %cst_9 {dimension_numbers = #tpu.dot_dimension_numbers<[1], [0], [0], [1], [0, 0, 1, 1], [], []>} : vector<1x128xbf16>, vector<128x256xbf16>, vector<1x256xf32> -> vector<1x256xf32>
    %13 = arith.addf %9, %12 : vector<1x256xf32>
    %14 = vector.extract_strided_slice %13 {offsets = [0, 0], sizes = [1, 128], strides = [1, 1]} : vector<1x256xf32> to vector<1x128xf32>
    %15 = vector.extract_strided_slice %13 {offsets = [0, 128], sizes = [1, 128], strides = [1, 1]} : vector<1x256xf32> to vector<1x128xf32>
    %16 = arith.negf %14 : vector<1x128xf32>
    %17 = math.exp %16 : vector<1x128xf32>
    %cst_10 = arith.constant 1.000000e+00 : f32
    %18 = vector.broadcast %cst_10 : f32 to vector<1x128xf32>
    %19 = arith.addf %18, %17 : vector<1x128xf32>
    %20 = arith.divf %18, %19 : vector<1x128xf32>
    %21 = math.tanh %15 : vector<1x128xf32>
    %22 = arith.negf %15 : vector<1x128xf32>
    %23 = math.exp %22 : vector<1x128xf32>
    %cst_11 = arith.constant 1.000000e+00 : f32
    %24 = vector.broadcast %cst_11 : f32 to vector<1x128xf32>
    %25 = arith.addf %24, %23 : vector<1x128xf32>
    %26 = arith.divf %24, %25 : vector<1x128xf32>
    %c64_i32 = arith.constant 64 : i32
    %27 = tpu.dynamic_rotate %20 by %c64_i32 dim 1 : vector<1x128xf32>, i32 -> vector<1x128xf32>
    %c64_i32_12 = arith.constant 64 : i32
    %28 = tpu.dynamic_rotate %26 by %c64_i32_12 dim 1 : vector<1x128xf32>, i32 -> vector<1x128xf32>
    %29 = arith.mulf %27, %3 : vector<1x128xf32>
    %30 = arith.mulf %20, %21 : vector<1x128xf32>
    %31 = arith.addf %29, %30 : vector<1x128xf32>
    %32 = math.tanh %31 : vector<1x128xf32>
    %33 = arith.mulf %28, %32 : vector<1x128xf32>
    %cst_13 = arith.constant 0.000000e+00 : f32
    %34 = vector.broadcast %cst_13 : f32 to vector<1x128xf32>
    %35 = arith.maximumf %33, %34 : vector<1x128xf32>
    %36 = vector.extract_strided_slice %8 {offsets = [1, 0], sizes = [1, 256], strides = [1, 1]} : vector<8x256xf32> to vector<1x256xf32>
    %37 = arith.truncf %33 : vector<1x128xf32> to vector<1x128xbf16>
    %c0_14 = arith.constant 0 : index
    %c0_15 = arith.constant 0 : index
    %38 = vector.load %arg2[%c0_14, %c0_15] : memref<128x256xbf16, #tpu.memory_space<vmem>>, vector<128x256xbf16>
    %cst_16 = arith.constant dense<0.000000e+00> : vector<1x256xf32>
    %39 = tpu.matmul %37, %38, %cst_16 {dimension_numbers = #tpu.dot_dimension_numbers<[1], [0], [0], [1], [0, 0, 1, 1], [], []>} : vector<1x128xbf16>, vector<128x256xbf16>, vector<1x256xf32> -> vector<1x256xf32>
    %40 = arith.addf %36, %39 : vector<1x256xf32>
    %41 = vector.extract_strided_slice %40 {offsets = [0, 0], sizes = [1, 128], strides = [1, 1]} : vector<1x256xf32> to vector<1x128xf32>
    %42 = vector.extract_strided_slice %40 {offsets = [0, 128], sizes = [1, 128], strides = [1, 1]} : vector<1x256xf32> to vector<1x128xf32>
    %43 = arith.negf %41 : vector<1x128xf32>
    %44 = math.exp %43 : vector<1x128xf32>
    %cst_17 = arith.constant 1.000000e+00 : f32
    %45 = vector.broadcast %cst_17 : f32 to vector<1x128xf32>
    %46 = arith.addf %45, %44 : vector<1x128xf32>
    %47 = arith.divf %45, %46 : vector<1x128xf32>
    %48 = math.tanh %42 : vector<1x128xf32>
    %49 = arith.negf %42 : vector<1x128xf32>
    %50 = math.exp %49 : vector<1x128xf32>
    %cst_18 = arith.constant 1.000000e+00 : f32
    %51 = vector.broadcast %cst_18 : f32 to vector<1x128xf32>
    %52 = arith.addf %51, %50 : vector<1x128xf32>
    %53 = arith.divf %51, %52 : vector<1x128xf32>
    %c64_i32_19 = arith.constant 64 : i32
    %54 = tpu.dynamic_rotate %47 by %c64_i32_19 dim 1 : vector<1x128xf32>, i32 -> vector<1x128xf32>
    %c64_i32_20 = arith.constant 64 : i32
    %55 = tpu.dynamic_rotate %53 by %c64_i32_20 dim 1 : vector<1x128xf32>, i32 -> vector<1x128xf32>
    %56 = arith.mulf %54, %31 : vector<1x128xf32>
    %57 = arith.mulf %47, %48 : vector<1x128xf32>
    %58 = arith.addf %56, %57 : vector<1x128xf32>
    %59 = math.tanh %58 : vector<1x128xf32>
    %60 = arith.mulf %55, %59 : vector<1x128xf32>
    %cst_21 = arith.constant 0.000000e+00 : f32
    %61 = vector.broadcast %cst_21 : f32 to vector<1x128xf32>
    %62 = arith.maximumf %60, %61 : vector<1x128xf32>
    %63 = vector.extract_strided_slice %8 {offsets = [2, 0], sizes = [1, 256], strides = [1, 1]} : vector<8x256xf32> to vector<1x256xf32>
    %64 = arith.truncf %60 : vector<1x128xf32> to vector<1x128xbf16>
    %c0_22 = arith.constant 0 : index
    %c0_23 = arith.constant 0 : index
    %65 = vector.load %arg2[%c0_22, %c0_23] : memref<128x256xbf16, #tpu.memory_space<vmem>>, vector<128x256xbf16>
    %cst_24 = arith.constant dense<0.000000e+00> : vector<1x256xf32>
    %66 = tpu.matmul %64, %65, %cst_24 {dimension_numbers = #tpu.dot_dimension_numbers<[1], [0], [0], [1], [0, 0, 1, 1], [], []>} : vector<1x128xbf16>, vector<128x256xbf16>, vector<1x256xf32> -> vector<1x256xf32>
    %67 = arith.addf %63, %66 : vector<1x256xf32>
    %68 = vector.extract_strided_slice %67 {offsets = [0, 0], sizes = [1, 128], strides = [1, 1]} : vector<1x256xf32> to vector<1x128xf32>
    %69 = vector.extract_strided_slice %67 {offsets = [0, 128], sizes = [1, 128], strides = [1, 1]} : vector<1x256xf32> to vector<1x128xf32>
    %70 = arith.negf %68 : vector<1x128xf32>
    %71 = math.exp %70 : vector<1x128xf32>
    %cst_25 = arith.constant 1.000000e+00 : f32
    %72 = vector.broadcast %cst_25 : f32 to vector<1x128xf32>
    %73 = arith.addf %72, %71 : vector<1x128xf32>
    %74 = arith.divf %72, %73 : vector<1x128xf32>
    %75 = math.tanh %69 : vector<1x128xf32>
    %76 = arith.negf %69 : vector<1x128xf32>
    %77 = math.exp %76 : vector<1x128xf32>
    %cst_26 = arith.constant 1.000000e+00 : f32
    %78 = vector.broadcast %cst_26 : f32 to vector<1x128xf32>
    %79 = arith.addf %78, %77 : vector<1x128xf32>
    %80 = arith.divf %78, %79 : vector<1x128xf32>
    %c64_i32_27 = arith.constant 64 : i32
    %81 = tpu.dynamic_rotate %74 by %c64_i32_27 dim 1 : vector<1x128xf32>, i32 -> vector<1x128xf32>
    %c64_i32_28 = arith.constant 64 : i32
    %82 = tpu.dynamic_rotate %80 by %c64_i32_28 dim 1 : vector<1x128xf32>, i32 -> vector<1x128xf32>
    %83 = arith.mulf %81, %58 : vector<1x128xf32>
    %84 = arith.mulf %74, %75 : vector<1x128xf32>
    %85 = arith.addf %83, %84 : vector<1x128xf32>
    %86 = math.tanh %85 : vector<1x128xf32>
    %87 = arith.mulf %82, %86 : vector<1x128xf32>
    %cst_29 = arith.constant 0.000000e+00 : f32
    %88 = vector.broadcast %cst_29 : f32 to vector<1x128xf32>
    %89 = arith.maximumf %87, %88 : vector<1x128xf32>
    %90 = vector.extract_strided_slice %8 {offsets = [3, 0], sizes = [1, 256], strides = [1, 1]} : vector<8x256xf32> to vector<1x256xf32>
    %91 = arith.truncf %87 : vector<1x128xf32> to vector<1x128xbf16>
    %c0_30 = arith.constant 0 : index
    %c0_31 = arith.constant 0 : index
    %92 = vector.load %arg2[%c0_30, %c0_31] : memref<128x256xbf16, #tpu.memory_space<vmem>>, vector<128x256xbf16>
    %cst_32 = arith.constant dense<0.000000e+00> : vector<1x256xf32>
    %93 = tpu.matmul %91, %92, %cst_32 {dimension_numbers = #tpu.dot_dimension_numbers<[1], [0], [0], [1], [0, 0, 1, 1], [], []>} : vector<1x128xbf16>, vector<128x256xbf16>, vector<1x256xf32> -> vector<1x256xf32>
    %94 = arith.addf %90, %93 : vector<1x256xf32>
    %95 = vector.extract_strided_slice %94 {offsets = [0, 0], sizes = [1, 128], strides = [1, 1]} : vector<1x256xf32> to vector<1x128xf32>
    %96 = vector.extract_strided_slice %94 {offsets = [0, 128], sizes = [1, 128], strides = [1, 1]} : vector<1x256xf32> to vector<1x128xf32>
    %97 = arith.negf %95 : vector<1x128xf32>
    %98 = math.exp %97 : vector<1x128xf32>
    %cst_33 = arith.constant 1.000000e+00 : f32
    %99 = vector.broadcast %cst_33 : f32 to vector<1x128xf32>
    %100 = arith.addf %99, %98 : vector<1x128xf32>
    %101 = arith.divf %99, %100 : vector<1x128xf32>
    %102 = math.tanh %96 : vector<1x128xf32>
    %103 = arith.negf %96 : vector<1x128xf32>
    %104 = math.exp %103 : vector<1x128xf32>
    %cst_34 = arith.constant 1.000000e+00 : f32
    %105 = vector.broadcast %cst_34 : f32 to vector<1x128xf32>
    %106 = arith.addf %105, %104 : vector<1x128xf32>
    %107 = arith.divf %105, %106 : vector<1x128xf32>
    %c64_i32_35 = arith.constant 64 : i32
    %108 = tpu.dynamic_rotate %101 by %c64_i32_35 dim 1 : vector<1x128xf32>, i32 -> vector<1x128xf32>
    %c64_i32_36 = arith.constant 64 : i32
    %109 = tpu.dynamic_rotate %107 by %c64_i32_36 dim 1 : vector<1x128xf32>, i32 -> vector<1x128xf32>
    %110 = arith.mulf %108, %85 : vector<1x128xf32>
    %111 = arith.mulf %101, %102 : vector<1x128xf32>
    %112 = arith.addf %110, %111 : vector<1x128xf32>
    %113 = math.tanh %112 : vector<1x128xf32>
    %114 = arith.mulf %109, %113 : vector<1x128xf32>
    %cst_37 = arith.constant 0.000000e+00 : f32
    %115 = vector.broadcast %cst_37 : f32 to vector<1x128xf32>
    %116 = arith.maximumf %114, %115 : vector<1x128xf32>
    %117 = vector.extract_strided_slice %8 {offsets = [4, 0], sizes = [1, 256], strides = [1, 1]} : vector<8x256xf32> to vector<1x256xf32>
    %118 = arith.truncf %114 : vector<1x128xf32> to vector<1x128xbf16>
    %c0_38 = arith.constant 0 : index
    %c0_39 = arith.constant 0 : index
    %119 = vector.load %arg2[%c0_38, %c0_39] : memref<128x256xbf16, #tpu.memory_space<vmem>>, vector<128x256xbf16>
    %cst_40 = arith.constant dense<0.000000e+00> : vector<1x256xf32>
    %120 = tpu.matmul %118, %119, %cst_40 {dimension_numbers = #tpu.dot_dimension_numbers<[1], [0], [0], [1], [0, 0, 1, 1], [], []>} : vector<1x128xbf16>, vector<128x256xbf16>, vector<1x256xf32> -> vector<1x256xf32>
    %121 = arith.addf %117, %120 : vector<1x256xf32>
    %122 = vector.extract_strided_slice %121 {offsets = [0, 0], sizes = [1, 128], strides = [1, 1]} : vector<1x256xf32> to vector<1x128xf32>
    %123 = vector.extract_strided_slice %121 {offsets = [0, 128], sizes = [1, 128], strides = [1, 1]} : vector<1x256xf32> to vector<1x128xf32>
    %124 = arith.negf %122 : vector<1x128xf32>
    %125 = math.exp %124 : vector<1x128xf32>
    %cst_41 = arith.constant 1.000000e+00 : f32
    %126 = vector.broadcast %cst_41 : f32 to vector<1x128xf32>
    %127 = arith.addf %126, %125 : vector<1x128xf32>
    %128 = arith.divf %126, %127 : vector<1x128xf32>
    %129 = math.tanh %123 : vector<1x128xf32>
    %130 = arith.negf %123 : vector<1x128xf32>
    %131 = math.exp %130 : vector<1x128xf32>
    %cst_42 = arith.constant 1.000000e+00 : f32
    %132 = vector.broadcast %cst_42 : f32 to vector<1x128xf32>
    %133 = arith.addf %132, %131 : vector<1x128xf32>
    %134 = arith.divf %132, %133 : vector<1x128xf32>
    %c64_i32_43 = arith.constant 64 : i32
    %135 = tpu.dynamic_rotate %128 by %c64_i32_43 dim 1 : vector<1x128xf32>, i32 -> vector<1x128xf32>
    %c64_i32_44 = arith.constant 64 : i32
    %136 = tpu.dynamic_rotate %134 by %c64_i32_44 dim 1 : vector<1x128xf32>, i32 -> vector<1x128xf32>
    %137 = arith.mulf %135, %112 : vector<1x128xf32>
    %138 = arith.mulf %128, %129 : vector<1x128xf32>
    %139 = arith.addf %137, %138 : vector<1x128xf32>
    %140 = math.tanh %139 : vector<1x128xf32>
    %141 = arith.mulf %136, %140 : vector<1x128xf32>
    %cst_45 = arith.constant 0.000000e+00 : f32
    %142 = vector.broadcast %cst_45 : f32 to vector<1x128xf32>
    %143 = arith.maximumf %141, %142 : vector<1x128xf32>
    %144 = vector.extract_strided_slice %8 {offsets = [5, 0], sizes = [1, 256], strides = [1, 1]} : vector<8x256xf32> to vector<1x256xf32>
    %145 = arith.truncf %141 : vector<1x128xf32> to vector<1x128xbf16>
    %c0_46 = arith.constant 0 : index
    %c0_47 = arith.constant 0 : index
    %146 = vector.load %arg2[%c0_46, %c0_47] : memref<128x256xbf16, #tpu.memory_space<vmem>>, vector<128x256xbf16>
    %cst_48 = arith.constant dense<0.000000e+00> : vector<1x256xf32>
    %147 = tpu.matmul %145, %146, %cst_48 {dimension_numbers = #tpu.dot_dimension_numbers<[1], [0], [0], [1], [0, 0, 1, 1], [], []>} : vector<1x128xbf16>, vector<128x256xbf16>, vector<1x256xf32> -> vector<1x256xf32>
    %148 = arith.addf %144, %147 : vector<1x256xf32>
    %149 = vector.extract_strided_slice %148 {offsets = [0, 0], sizes = [1, 128], strides = [1, 1]} : vector<1x256xf32> to vector<1x128xf32>
    %150 = vector.extract_strided_slice %148 {offsets = [0, 128], sizes = [1, 128], strides = [1, 1]} : vector<1x256xf32> to vector<1x128xf32>
    %151 = arith.negf %149 : vector<1x128xf32>
    %152 = math.exp %151 : vector<1x128xf32>
    %cst_49 = arith.constant 1.000000e+00 : f32
    %153 = vector.broadcast %cst_49 : f32 to vector<1x128xf32>
    %154 = arith.addf %153, %152 : vector<1x128xf32>
    %155 = arith.divf %153, %154 : vector<1x128xf32>
    %156 = math.tanh %150 : vector<1x128xf32>
    %157 = arith.negf %150 : vector<1x128xf32>
    %158 = math.exp %157 : vector<1x128xf32>
    %cst_50 = arith.constant 1.000000e+00 : f32
    %159 = vector.broadcast %cst_50 : f32 to vector<1x128xf32>
    %160 = arith.addf %159, %158 : vector<1x128xf32>
    %161 = arith.divf %159, %160 : vector<1x128xf32>
    %c64_i32_51 = arith.constant 64 : i32
    %162 = tpu.dynamic_rotate %155 by %c64_i32_51 dim 1 : vector<1x128xf32>, i32 -> vector<1x128xf32>
    %c64_i32_52 = arith.constant 64 : i32
    %163 = tpu.dynamic_rotate %161 by %c64_i32_52 dim 1 : vector<1x128xf32>, i32 -> vector<1x128xf32>
    %164 = arith.mulf %162, %139 : vector<1x128xf32>
    %165 = arith.mulf %155, %156 : vector<1x128xf32>
    %166 = arith.addf %164, %165 : vector<1x128xf32>
    %167 = math.tanh %166 : vector<1x128xf32>
    %168 = arith.mulf %163, %167 : vector<1x128xf32>
    %cst_53 = arith.constant 0.000000e+00 : f32
    %169 = vector.broadcast %cst_53 : f32 to vector<1x128xf32>
    %170 = arith.maximumf %168, %169 : vector<1x128xf32>
    %171 = vector.extract_strided_slice %8 {offsets = [6, 0], sizes = [1, 256], strides = [1, 1]} : vector<8x256xf32> to vector<1x256xf32>
    %172 = arith.truncf %168 : vector<1x128xf32> to vector<1x128xbf16>
    %c0_54 = arith.constant 0 : index
    %c0_55 = arith.constant 0 : index
    %173 = vector.load %arg2[%c0_54, %c0_55] : memref<128x256xbf16, #tpu.memory_space<vmem>>, vector<128x256xbf16>
    %cst_56 = arith.constant dense<0.000000e+00> : vector<1x256xf32>
    %174 = tpu.matmul %172, %173, %cst_56 {dimension_numbers = #tpu.dot_dimension_numbers<[1], [0], [0], [1], [0, 0, 1, 1], [], []>} : vector<1x128xbf16>, vector<128x256xbf16>, vector<1x256xf32> -> vector<1x256xf32>
    %175 = arith.addf %171, %174 : vector<1x256xf32>
    %176 = vector.extract_strided_slice %175 {offsets = [0, 0], sizes = [1, 128], strides = [1, 1]} : vector<1x256xf32> to vector<1x128xf32>
    %177 = vector.extract_strided_slice %175 {offsets = [0, 128], sizes = [1, 128], strides = [1, 1]} : vector<1x256xf32> to vector<1x128xf32>
    %178 = arith.negf %176 : vector<1x128xf32>
    %179 = math.exp %178 : vector<1x128xf32>
    %cst_57 = arith.constant 1.000000e+00 : f32
    %180 = vector.broadcast %cst_57 : f32 to vector<1x128xf32>
    %181 = arith.addf %180, %179 : vector<1x128xf32>
    %182 = arith.divf %180, %181 : vector<1x128xf32>
    %183 = math.tanh %177 : vector<1x128xf32>
    %184 = arith.negf %177 : vector<1x128xf32>
    %185 = math.exp %184 : vector<1x128xf32>
    %cst_58 = arith.constant 1.000000e+00 : f32
    %186 = vector.broadcast %cst_58 : f32 to vector<1x128xf32>
    %187 = arith.addf %186, %185 : vector<1x128xf32>
    %188 = arith.divf %186, %187 : vector<1x128xf32>
    %c64_i32_59 = arith.constant 64 : i32
    %189 = tpu.dynamic_rotate %182 by %c64_i32_59 dim 1 : vector<1x128xf32>, i32 -> vector<1x128xf32>
    %c64_i32_60 = arith.constant 64 : i32
    %190 = tpu.dynamic_rotate %188 by %c64_i32_60 dim 1 : vector<1x128xf32>, i32 -> vector<1x128xf32>
    %191 = arith.mulf %189, %166 : vector<1x128xf32>
    %192 = arith.mulf %182, %183 : vector<1x128xf32>
    %193 = arith.addf %191, %192 : vector<1x128xf32>
    %194 = math.tanh %193 : vector<1x128xf32>
    %195 = arith.mulf %190, %194 : vector<1x128xf32>
    %cst_61 = arith.constant 0.000000e+00 : f32
    %196 = vector.broadcast %cst_61 : f32 to vector<1x128xf32>
    %197 = arith.maximumf %195, %196 : vector<1x128xf32>
    %198 = vector.extract_strided_slice %8 {offsets = [7, 0], sizes = [1, 256], strides = [1, 1]} : vector<8x256xf32> to vector<1x256xf32>
    %199 = arith.truncf %195 : vector<1x128xf32> to vector<1x128xbf16>
    %c0_62 = arith.constant 0 : index
    %c0_63 = arith.constant 0 : index
    %200 = vector.load %arg2[%c0_62, %c0_63] : memref<128x256xbf16, #tpu.memory_space<vmem>>, vector<128x256xbf16>
    %cst_64 = arith.constant dense<0.000000e+00> : vector<1x256xf32>
    %201 = tpu.matmul %199, %200, %cst_64 {dimension_numbers = #tpu.dot_dimension_numbers<[1], [0], [0], [1], [0, 0, 1, 1], [], []>} : vector<1x128xbf16>, vector<128x256xbf16>, vector<1x256xf32> -> vector<1x256xf32>
    %202 = arith.addf %198, %201 : vector<1x256xf32>
    %203 = vector.extract_strided_slice %202 {offsets = [0, 0], sizes = [1, 128], strides = [1, 1]} : vector<1x256xf32> to vector<1x128xf32>
    %204 = vector.extract_strided_slice %202 {offsets = [0, 128], sizes = [1, 128], strides = [1, 1]} : vector<1x256xf32> to vector<1x128xf32>
    %205 = arith.negf %203 : vector<1x128xf32>
    %206 = math.exp %205 : vector<1x128xf32>
    %cst_65 = arith.constant 1.000000e+00 : f32
    %207 = vector.broadcast %cst_65 : f32 to vector<1x128xf32>
    %208 = arith.addf %207, %206 : vector<1x128xf32>
    %209 = arith.divf %207, %208 : vector<1x128xf32>
    %210 = math.tanh %204 : vector<1x128xf32>
    %211 = arith.negf %204 : vector<1x128xf32>
    %212 = math.exp %211 : vector<1x128xf32>
    %cst_66 = arith.constant 1.000000e+00 : f32
    %213 = vector.broadcast %cst_66 : f32 to vector<1x128xf32>
    %214 = arith.addf %213, %212 : vector<1x128xf32>
    %215 = arith.divf %213, %214 : vector<1x128xf32>
    %c64_i32_67 = arith.constant 64 : i32
    %216 = tpu.dynamic_rotate %209 by %c64_i32_67 dim 1 : vector<1x128xf32>, i32 -> vector<1x128xf32>
    %c64_i32_68 = arith.constant 64 : i32
    %217 = tpu.dynamic_rotate %215 by %c64_i32_68 dim 1 : vector<1x128xf32>, i32 -> vector<1x128xf32>
    %218 = arith.mulf %216, %193 : vector<1x128xf32>
    %219 = arith.mulf %209, %210 : vector<1x128xf32>
    %220 = arith.addf %218, %219 : vector<1x128xf32>
    %221 = math.tanh %220 : vector<1x128xf32>
    %222 = arith.mulf %217, %221 : vector<1x128xf32>
    %cst_69 = arith.constant 0.000000e+00 : f32
    %223 = vector.broadcast %cst_69 : f32 to vector<1x128xf32>
    %224 = arith.maximumf %222, %223 : vector<1x128xf32>
    %225 = tpu.concatenate %35, %62, %89, %116, %143, %170, %197, %224 in 0 : vector<1x128xf32>, vector<1x128xf32>, vector<1x128xf32>, vector<1x128xf32>, vector<1x128xf32>, vector<1x128xf32>, vector<1x128xf32>, vector<1x128xf32> -> vector<8x128xf32>
    %226 = arith.truncf %225 : vector<8x128xf32> to vector<8x128xbf16>
    %c32_i32 = arith.constant 32 : i32
    %227 = vector.broadcast %c32_i32 : i32 to vector<1x128xi32>
    %228 = arith.cmpi slt, %0, %227 : vector<1x128xi32>
    %cst_70 = arith.constant 0.000000e+00 : f32
    %229 = vector.broadcast %cst_70 : f32 to vector<1x128xf32>
    %230 = arith.select %228, %222, %229 : vector<1x128xi1>, vector<1x128xf32>
    %cst_71 = arith.constant 0.000000e+00 : f32
    %231 = vector.broadcast %cst_71 : f32 to vector<1x128xf32>
    %c0_72 = arith.constant 0 : index
    %c0_73 = arith.constant 0 : index
    %232 = vector.load %arg4[%c0_72, %c0_73] : memref<128x256xbf16, #tpu.memory_space<vmem>>, vector<128x256xbf16>
    %cst_74 = arith.constant dense<0.000000e+00> : vector<8x256xf32>
    %233 = tpu.matmul %226, %232, %cst_74 {dimension_numbers = #tpu.dot_dimension_numbers<[1], [0], [0], [1], [0, 0, 1, 1], [], []>} : vector<8x128xbf16>, vector<128x256xbf16>, vector<8x256xf32> -> vector<8x256xf32>
    %c0_75 = arith.constant 0 : index
    %c0_76 = arith.constant 0 : index
    %234 = vector.load %arg6[%c0_75, %c0_76] : memref<1x256xf32, #tpu.memory_space<vmem>>, vector<1x256xf32>
    %235 = vector.broadcast %234 : vector<1x256xf32> to vector<8x256xf32>
    %236 = arith.addf %233, %235 : vector<8x256xf32>
    %237 = vector.extract_strided_slice %236 {offsets = [0, 0], sizes = [1, 256], strides = [1, 1]} : vector<8x256xf32> to vector<1x256xf32>
    %238 = arith.truncf %230 : vector<1x128xf32> to vector<1x128xbf16>
    %c0_77 = arith.constant 0 : index
    %c0_78 = arith.constant 0 : index
    %239 = vector.load %arg5[%c0_77, %c0_78] : memref<128x256xbf16, #tpu.memory_space<vmem>>, vector<128x256xbf16>
    %cst_79 = arith.constant dense<0.000000e+00> : vector<1x256xf32>
    %240 = tpu.matmul %238, %239, %cst_79 {dimension_numbers = #tpu.dot_dimension_numbers<[1], [0], [0], [1], [0, 0, 1, 1], [], []>} : vector<1x128xbf16>, vector<128x256xbf16>, vector<1x256xf32> -> vector<1x256xf32>
    %241 = arith.addf %237, %240 : vector<1x256xf32>
    %242 = vector.extract_strided_slice %241 {offsets = [0, 0], sizes = [1, 128], strides = [1, 1]} : vector<1x256xf32> to vector<1x128xf32>
    %243 = vector.extract_strided_slice %241 {offsets = [0, 128], sizes = [1, 128], strides = [1, 1]} : vector<1x256xf32> to vector<1x128xf32>
    %244 = arith.negf %242 : vector<1x128xf32>
    %245 = math.exp %244 : vector<1x128xf32>
    %cst_80 = arith.constant 1.000000e+00 : f32
    %246 = vector.broadcast %cst_80 : f32 to vector<1x128xf32>
    %247 = arith.addf %246, %245 : vector<1x128xf32>
    %248 = arith.divf %246, %247 : vector<1x128xf32>
    %249 = math.tanh %243 : vector<1x128xf32>
    %250 = arith.negf %243 : vector<1x128xf32>
    %251 = math.exp %250 : vector<1x128xf32>
    %cst_81 = arith.constant 1.000000e+00 : f32
    %252 = vector.broadcast %cst_81 : f32 to vector<1x128xf32>
    %253 = arith.addf %252, %251 : vector<1x128xf32>
    %254 = arith.divf %252, %253 : vector<1x128xf32>
    %c64_i32_82 = arith.constant 64 : i32
    %255 = tpu.dynamic_rotate %248 by %c64_i32_82 dim 1 : vector<1x128xf32>, i32 -> vector<1x128xf32>
    %c64_i32_83 = arith.constant 64 : i32
    %256 = tpu.dynamic_rotate %254 by %c64_i32_83 dim 1 : vector<1x128xf32>, i32 -> vector<1x128xf32>
    %257 = arith.mulf %255, %231 : vector<1x128xf32>
    %258 = arith.mulf %248, %249 : vector<1x128xf32>
    %259 = arith.addf %257, %258 : vector<1x128xf32>
    %260 = math.tanh %259 : vector<1x128xf32>
    %261 = arith.mulf %256, %260 : vector<1x128xf32>
    %cst_84 = arith.constant 0.000000e+00 : f32
    %262 = vector.broadcast %cst_84 : f32 to vector<1x128xf32>
    %263 = arith.maximumf %261, %262 : vector<1x128xf32>
    %264 = vector.extract_strided_slice %236 {offsets = [1, 0], sizes = [1, 256], strides = [1, 1]} : vector<8x256xf32> to vector<1x256xf32>
    %265 = arith.truncf %261 : vector<1x128xf32> to vector<1x128xbf16>
    %c0_85 = arith.constant 0 : index
    %c0_86 = arith.constant 0 : index
    %266 = vector.load %arg5[%c0_85, %c0_86] : memref<128x256xbf16, #tpu.memory_space<vmem>>, vector<128x256xbf16>
    %cst_87 = arith.constant dense<0.000000e+00> : vector<1x256xf32>
    %267 = tpu.matmul %265, %266, %cst_87 {dimension_numbers = #tpu.dot_dimension_numbers<[1], [0], [0], [1], [0, 0, 1, 1], [], []>} : vector<1x128xbf16>, vector<128x256xbf16>, vector<1x256xf32> -> vector<1x256xf32>
    %268 = arith.addf %264, %267 : vector<1x256xf32>
    %269 = vector.extract_strided_slice %268 {offsets = [0, 0], sizes = [1, 128], strides = [1, 1]} : vector<1x256xf32> to vector<1x128xf32>
    %270 = vector.extract_strided_slice %268 {offsets = [0, 128], sizes = [1, 128], strides = [1, 1]} : vector<1x256xf32> to vector<1x128xf32>
    %271 = arith.negf %269 : vector<1x128xf32>
    %272 = math.exp %271 : vector<1x128xf32>
    %cst_88 = arith.constant 1.000000e+00 : f32
    %273 = vector.broadcast %cst_88 : f32 to vector<1x128xf32>
    %274 = arith.addf %273, %272 : vector<1x128xf32>
    %275 = arith.divf %273, %274 : vector<1x128xf32>
    %276 = math.tanh %270 : vector<1x128xf32>
    %277 = arith.negf %270 : vector<1x128xf32>
    %278 = math.exp %277 : vector<1x128xf32>
    %cst_89 = arith.constant 1.000000e+00 : f32
    %279 = vector.broadcast %cst_89 : f32 to vector<1x128xf32>
    %280 = arith.addf %279, %278 : vector<1x128xf32>
    %281 = arith.divf %279, %280 : vector<1x128xf32>
    %c64_i32_90 = arith.constant 64 : i32
    %282 = tpu.dynamic_rotate %275 by %c64_i32_90 dim 1 : vector<1x128xf32>, i32 -> vector<1x128xf32>
    %c64_i32_91 = arith.constant 64 : i32
    %283 = tpu.dynamic_rotate %281 by %c64_i32_91 dim 1 : vector<1x128xf32>, i32 -> vector<1x128xf32>
    %284 = arith.mulf %282, %259 : vector<1x128xf32>
    %285 = arith.mulf %275, %276 : vector<1x128xf32>
    %286 = arith.addf %284, %285 : vector<1x128xf32>
    %287 = math.tanh %286 : vector<1x128xf32>
    %288 = arith.mulf %283, %287 : vector<1x128xf32>
    %cst_92 = arith.constant 0.000000e+00 : f32
    %289 = vector.broadcast %cst_92 : f32 to vector<1x128xf32>
    %290 = arith.maximumf %288, %289 : vector<1x128xf32>
    %291 = vector.extract_strided_slice %236 {offsets = [2, 0], sizes = [1, 256], strides = [1, 1]} : vector<8x256xf32> to vector<1x256xf32>
    %292 = arith.truncf %288 : vector<1x128xf32> to vector<1x128xbf16>
    %c0_93 = arith.constant 0 : index
    %c0_94 = arith.constant 0 : index
    %293 = vector.load %arg5[%c0_93, %c0_94] : memref<128x256xbf16, #tpu.memory_space<vmem>>, vector<128x256xbf16>
    %cst_95 = arith.constant dense<0.000000e+00> : vector<1x256xf32>
    %294 = tpu.matmul %292, %293, %cst_95 {dimension_numbers = #tpu.dot_dimension_numbers<[1], [0], [0], [1], [0, 0, 1, 1], [], []>} : vector<1x128xbf16>, vector<128x256xbf16>, vector<1x256xf32> -> vector<1x256xf32>
    %295 = arith.addf %291, %294 : vector<1x256xf32>
    %296 = vector.extract_strided_slice %295 {offsets = [0, 0], sizes = [1, 128], strides = [1, 1]} : vector<1x256xf32> to vector<1x128xf32>
    %297 = vector.extract_strided_slice %295 {offsets = [0, 128], sizes = [1, 128], strides = [1, 1]} : vector<1x256xf32> to vector<1x128xf32>
    %298 = arith.negf %296 : vector<1x128xf32>
    %299 = math.exp %298 : vector<1x128xf32>
    %cst_96 = arith.constant 1.000000e+00 : f32
    %300 = vector.broadcast %cst_96 : f32 to vector<1x128xf32>
    %301 = arith.addf %300, %299 : vector<1x128xf32>
    %302 = arith.divf %300, %301 : vector<1x128xf32>
    %303 = math.tanh %297 : vector<1x128xf32>
    %304 = arith.negf %297 : vector<1x128xf32>
    %305 = math.exp %304 : vector<1x128xf32>
    %cst_97 = arith.constant 1.000000e+00 : f32
    %306 = vector.broadcast %cst_97 : f32 to vector<1x128xf32>
    %307 = arith.addf %306, %305 : vector<1x128xf32>
    %308 = arith.divf %306, %307 : vector<1x128xf32>
    %c64_i32_98 = arith.constant 64 : i32
    %309 = tpu.dynamic_rotate %302 by %c64_i32_98 dim 1 : vector<1x128xf32>, i32 -> vector<1x128xf32>
    %c64_i32_99 = arith.constant 64 : i32
    %310 = tpu.dynamic_rotate %308 by %c64_i32_99 dim 1 : vector<1x128xf32>, i32 -> vector<1x128xf32>
    %311 = arith.mulf %309, %286 : vector<1x128xf32>
    %312 = arith.mulf %302, %303 : vector<1x128xf32>
    %313 = arith.addf %311, %312 : vector<1x128xf32>
    %314 = math.tanh %313 : vector<1x128xf32>
    %315 = arith.mulf %310, %314 : vector<1x128xf32>
    %cst_100 = arith.constant 0.000000e+00 : f32
    %316 = vector.broadcast %cst_100 : f32 to vector<1x128xf32>
    %317 = arith.maximumf %315, %316 : vector<1x128xf32>
    %318 = vector.extract_strided_slice %236 {offsets = [3, 0], sizes = [1, 256], strides = [1, 1]} : vector<8x256xf32> to vector<1x256xf32>
    %319 = arith.truncf %315 : vector<1x128xf32> to vector<1x128xbf16>
    %c0_101 = arith.constant 0 : index
    %c0_102 = arith.constant 0 : index
    %320 = vector.load %arg5[%c0_101, %c0_102] : memref<128x256xbf16, #tpu.memory_space<vmem>>, vector<128x256xbf16>
    %cst_103 = arith.constant dense<0.000000e+00> : vector<1x256xf32>
    %321 = tpu.matmul %319, %320, %cst_103 {dimension_numbers = #tpu.dot_dimension_numbers<[1], [0], [0], [1], [0, 0, 1, 1], [], []>} : vector<1x128xbf16>, vector<128x256xbf16>, vector<1x256xf32> -> vector<1x256xf32>
    %322 = arith.addf %318, %321 : vector<1x256xf32>
    %323 = vector.extract_strided_slice %322 {offsets = [0, 0], sizes = [1, 128], strides = [1, 1]} : vector<1x256xf32> to vector<1x128xf32>
    %324 = vector.extract_strided_slice %322 {offsets = [0, 128], sizes = [1, 128], strides = [1, 1]} : vector<1x256xf32> to vector<1x128xf32>
    %325 = arith.negf %323 : vector<1x128xf32>
    %326 = math.exp %325 : vector<1x128xf32>
    %cst_104 = arith.constant 1.000000e+00 : f32
    %327 = vector.broadcast %cst_104 : f32 to vector<1x128xf32>
    %328 = arith.addf %327, %326 : vector<1x128xf32>
    %329 = arith.divf %327, %328 : vector<1x128xf32>
    %330 = math.tanh %324 : vector<1x128xf32>
    %331 = arith.negf %324 : vector<1x128xf32>
    %332 = math.exp %331 : vector<1x128xf32>
    %cst_105 = arith.constant 1.000000e+00 : f32
    %333 = vector.broadcast %cst_105 : f32 to vector<1x128xf32>
    %334 = arith.addf %333, %332 : vector<1x128xf32>
    %335 = arith.divf %333, %334 : vector<1x128xf32>
    %c64_i32_106 = arith.constant 64 : i32
    %336 = tpu.dynamic_rotate %329 by %c64_i32_106 dim 1 : vector<1x128xf32>, i32 -> vector<1x128xf32>
    %c64_i32_107 = arith.constant 64 : i32
    %337 = tpu.dynamic_rotate %335 by %c64_i32_107 dim 1 : vector<1x128xf32>, i32 -> vector<1x128xf32>
    %338 = arith.mulf %336, %313 : vector<1x128xf32>
    %339 = arith.mulf %329, %330 : vector<1x128xf32>
    %340 = arith.addf %338, %339 : vector<1x128xf32>
    %341 = math.tanh %340 : vector<1x128xf32>
    %342 = arith.mulf %337, %341 : vector<1x128xf32>
    %cst_108 = arith.constant 0.000000e+00 : f32
    %343 = vector.broadcast %cst_108 : f32 to vector<1x128xf32>
    %344 = arith.maximumf %342, %343 : vector<1x128xf32>
    %345 = vector.extract_strided_slice %236 {offsets = [4, 0], sizes = [1, 256], strides = [1, 1]} : vector<8x256xf32> to vector<1x256xf32>
    %346 = arith.truncf %342 : vector<1x128xf32> to vector<1x128xbf16>
    %c0_109 = arith.constant 0 : index
    %c0_110 = arith.constant 0 : index
    %347 = vector.load %arg5[%c0_109, %c0_110] : memref<128x256xbf16, #tpu.memory_space<vmem>>, vector<128x256xbf16>
    %cst_111 = arith.constant dense<0.000000e+00> : vector<1x256xf32>
    %348 = tpu.matmul %346, %347, %cst_111 {dimension_numbers = #tpu.dot_dimension_numbers<[1], [0], [0], [1], [0, 0, 1, 1], [], []>} : vector<1x128xbf16>, vector<128x256xbf16>, vector<1x256xf32> -> vector<1x256xf32>
    %349 = arith.addf %345, %348 : vector<1x256xf32>
    %350 = vector.extract_strided_slice %349 {offsets = [0, 0], sizes = [1, 128], strides = [1, 1]} : vector<1x256xf32> to vector<1x128xf32>
    %351 = vector.extract_strided_slice %349 {offsets = [0, 128], sizes = [1, 128], strides = [1, 1]} : vector<1x256xf32> to vector<1x128xf32>
    %352 = arith.negf %350 : vector<1x128xf32>
    %353 = math.exp %352 : vector<1x128xf32>
    %cst_112 = arith.constant 1.000000e+00 : f32
    %354 = vector.broadcast %cst_112 : f32 to vector<1x128xf32>
    %355 = arith.addf %354, %353 : vector<1x128xf32>
    %356 = arith.divf %354, %355 : vector<1x128xf32>
    %357 = math.tanh %351 : vector<1x128xf32>
    %358 = arith.negf %351 : vector<1x128xf32>
    %359 = math.exp %358 : vector<1x128xf32>
    %cst_113 = arith.constant 1.000000e+00 : f32
    %360 = vector.broadcast %cst_113 : f32 to vector<1x128xf32>
    %361 = arith.addf %360, %359 : vector<1x128xf32>
    %362 = arith.divf %360, %361 : vector<1x128xf32>
    %c64_i32_114 = arith.constant 64 : i32
    %363 = tpu.dynamic_rotate %356 by %c64_i32_114 dim 1 : vector<1x128xf32>, i32 -> vector<1x128xf32>
    %c64_i32_115 = arith.constant 64 : i32
    %364 = tpu.dynamic_rotate %362 by %c64_i32_115 dim 1 : vector<1x128xf32>, i32 -> vector<1x128xf32>
    %365 = arith.mulf %363, %340 : vector<1x128xf32>
    %366 = arith.mulf %356, %357 : vector<1x128xf32>
    %367 = arith.addf %365, %366 : vector<1x128xf32>
    %368 = math.tanh %367 : vector<1x128xf32>
    %369 = arith.mulf %364, %368 : vector<1x128xf32>
    %cst_116 = arith.constant 0.000000e+00 : f32
    %370 = vector.broadcast %cst_116 : f32 to vector<1x128xf32>
    %371 = arith.maximumf %369, %370 : vector<1x128xf32>
    %372 = vector.extract_strided_slice %236 {offsets = [5, 0], sizes = [1, 256], strides = [1, 1]} : vector<8x256xf32> to vector<1x256xf32>
    %373 = arith.truncf %369 : vector<1x128xf32> to vector<1x128xbf16>
    %c0_117 = arith.constant 0 : index
    %c0_118 = arith.constant 0 : index
    %374 = vector.load %arg5[%c0_117, %c0_118] : memref<128x256xbf16, #tpu.memory_space<vmem>>, vector<128x256xbf16>
    %cst_119 = arith.constant dense<0.000000e+00> : vector<1x256xf32>
    %375 = tpu.matmul %373, %374, %cst_119 {dimension_numbers = #tpu.dot_dimension_numbers<[1], [0], [0], [1], [0, 0, 1, 1], [], []>} : vector<1x128xbf16>, vector<128x256xbf16>, vector<1x256xf32> -> vector<1x256xf32>
    %376 = arith.addf %372, %375 : vector<1x256xf32>
    %377 = vector.extract_strided_slice %376 {offsets = [0, 0], sizes = [1, 128], strides = [1, 1]} : vector<1x256xf32> to vector<1x128xf32>
    %378 = vector.extract_strided_slice %376 {offsets = [0, 128], sizes = [1, 128], strides = [1, 1]} : vector<1x256xf32> to vector<1x128xf32>
    %379 = arith.negf %377 : vector<1x128xf32>
    %380 = math.exp %379 : vector<1x128xf32>
    %cst_120 = arith.constant 1.000000e+00 : f32
    %381 = vector.broadcast %cst_120 : f32 to vector<1x128xf32>
    %382 = arith.addf %381, %380 : vector<1x128xf32>
    %383 = arith.divf %381, %382 : vector<1x128xf32>
    %384 = math.tanh %378 : vector<1x128xf32>
    %385 = arith.negf %378 : vector<1x128xf32>
    %386 = math.exp %385 : vector<1x128xf32>
    %cst_121 = arith.constant 1.000000e+00 : f32
    %387 = vector.broadcast %cst_121 : f32 to vector<1x128xf32>
    %388 = arith.addf %387, %386 : vector<1x128xf32>
    %389 = arith.divf %387, %388 : vector<1x128xf32>
    %c64_i32_122 = arith.constant 64 : i32
    %390 = tpu.dynamic_rotate %383 by %c64_i32_122 dim 1 : vector<1x128xf32>, i32 -> vector<1x128xf32>
    %c64_i32_123 = arith.constant 64 : i32
    %391 = tpu.dynamic_rotate %389 by %c64_i32_123 dim 1 : vector<1x128xf32>, i32 -> vector<1x128xf32>
    %392 = arith.mulf %390, %367 : vector<1x128xf32>
    %393 = arith.mulf %383, %384 : vector<1x128xf32>
    %394 = arith.addf %392, %393 : vector<1x128xf32>
    %395 = math.tanh %394 : vector<1x128xf32>
    %396 = arith.mulf %391, %395 : vector<1x128xf32>
    %cst_124 = arith.constant 0.000000e+00 : f32
    %397 = vector.broadcast %cst_124 : f32 to vector<1x128xf32>
    %398 = arith.maximumf %396, %397 : vector<1x128xf32>
    %399 = vector.extract_strided_slice %236 {offsets = [6, 0], sizes = [1, 256], strides = [1, 1]} : vector<8x256xf32> to vector<1x256xf32>
    %400 = arith.truncf %396 : vector<1x128xf32> to vector<1x128xbf16>
    %c0_125 = arith.constant 0 : index
    %c0_126 = arith.constant 0 : index
    %401 = vector.load %arg5[%c0_125, %c0_126] : memref<128x256xbf16, #tpu.memory_space<vmem>>, vector<128x256xbf16>
    %cst_127 = arith.constant dense<0.000000e+00> : vector<1x256xf32>
    %402 = tpu.matmul %400, %401, %cst_127 {dimension_numbers = #tpu.dot_dimension_numbers<[1], [0], [0], [1], [0, 0, 1, 1], [], []>} : vector<1x128xbf16>, vector<128x256xbf16>, vector<1x256xf32> -> vector<1x256xf32>
    %403 = arith.addf %399, %402 : vector<1x256xf32>
    %404 = vector.extract_strided_slice %403 {offsets = [0, 0], sizes = [1, 128], strides = [1, 1]} : vector<1x256xf32> to vector<1x128xf32>
    %405 = vector.extract_strided_slice %403 {offsets = [0, 128], sizes = [1, 128], strides = [1, 1]} : vector<1x256xf32> to vector<1x128xf32>
    %406 = arith.negf %404 : vector<1x128xf32>
    %407 = math.exp %406 : vector<1x128xf32>
    %cst_128 = arith.constant 1.000000e+00 : f32
    %408 = vector.broadcast %cst_128 : f32 to vector<1x128xf32>
    %409 = arith.addf %408, %407 : vector<1x128xf32>
    %410 = arith.divf %408, %409 : vector<1x128xf32>
    %411 = math.tanh %405 : vector<1x128xf32>
    %412 = arith.negf %405 : vector<1x128xf32>
    %413 = math.exp %412 : vector<1x128xf32>
    %cst_129 = arith.constant 1.000000e+00 : f32
    %414 = vector.broadcast %cst_129 : f32 to vector<1x128xf32>
    %415 = arith.addf %414, %413 : vector<1x128xf32>
    %416 = arith.divf %414, %415 : vector<1x128xf32>
    %c64_i32_130 = arith.constant 64 : i32
    %417 = tpu.dynamic_rotate %410 by %c64_i32_130 dim 1 : vector<1x128xf32>, i32 -> vector<1x128xf32>
    %c64_i32_131 = arith.constant 64 : i32
    %418 = tpu.dynamic_rotate %416 by %c64_i32_131 dim 1 : vector<1x128xf32>, i32 -> vector<1x128xf32>
    %419 = arith.mulf %417, %394 : vector<1x128xf32>
    %420 = arith.mulf %410, %411 : vector<1x128xf32>
    %421 = arith.addf %419, %420 : vector<1x128xf32>
    %422 = math.tanh %421 : vector<1x128xf32>
    %423 = arith.mulf %418, %422 : vector<1x128xf32>
    %cst_132 = arith.constant 0.000000e+00 : f32
    %424 = vector.broadcast %cst_132 : f32 to vector<1x128xf32>
    %425 = arith.maximumf %423, %424 : vector<1x128xf32>
    %426 = vector.extract_strided_slice %236 {offsets = [7, 0], sizes = [1, 256], strides = [1, 1]} : vector<8x256xf32> to vector<1x256xf32>
    %427 = arith.truncf %423 : vector<1x128xf32> to vector<1x128xbf16>
    %c0_133 = arith.constant 0 : index
    %c0_134 = arith.constant 0 : index
    %428 = vector.load %arg5[%c0_133, %c0_134] : memref<128x256xbf16, #tpu.memory_space<vmem>>, vector<128x256xbf16>
    %cst_135 = arith.constant dense<0.000000e+00> : vector<1x256xf32>
    %429 = tpu.matmul %427, %428, %cst_135 {dimension_numbers = #tpu.dot_dimension_numbers<[1], [0], [0], [1], [0, 0, 1, 1], [], []>} : vector<1x128xbf16>, vector<128x256xbf16>, vector<1x256xf32> -> vector<1x256xf32>
    %430 = arith.addf %426, %429 : vector<1x256xf32>
    %431 = vector.extract_strided_slice %430 {offsets = [0, 0], sizes = [1, 128], strides = [1, 1]} : vector<1x256xf32> to vector<1x128xf32>
    %432 = vector.extract_strided_slice %430 {offsets = [0, 128], sizes = [1, 128], strides = [1, 1]} : vector<1x256xf32> to vector<1x128xf32>
    %433 = arith.negf %431 : vector<1x128xf32>
    %434 = math.exp %433 : vector<1x128xf32>
    %cst_136 = arith.constant 1.000000e+00 : f32
    %435 = vector.broadcast %cst_136 : f32 to vector<1x128xf32>
    %436 = arith.addf %435, %434 : vector<1x128xf32>
    %437 = arith.divf %435, %436 : vector<1x128xf32>
    %438 = math.tanh %432 : vector<1x128xf32>
    %439 = arith.negf %432 : vector<1x128xf32>
    %440 = math.exp %439 : vector<1x128xf32>
    %cst_137 = arith.constant 1.000000e+00 : f32
    %441 = vector.broadcast %cst_137 : f32 to vector<1x128xf32>
    %442 = arith.addf %441, %440 : vector<1x128xf32>
    %443 = arith.divf %441, %442 : vector<1x128xf32>
    %c64_i32_138 = arith.constant 64 : i32
    %444 = tpu.dynamic_rotate %437 by %c64_i32_138 dim 1 : vector<1x128xf32>, i32 -> vector<1x128xf32>
    %c64_i32_139 = arith.constant 64 : i32
    %445 = tpu.dynamic_rotate %443 by %c64_i32_139 dim 1 : vector<1x128xf32>, i32 -> vector<1x128xf32>
    %446 = arith.mulf %444, %421 : vector<1x128xf32>
    %447 = arith.mulf %437, %438 : vector<1x128xf32>
    %448 = arith.addf %446, %447 : vector<1x128xf32>
    %449 = math.tanh %448 : vector<1x128xf32>
    %450 = arith.mulf %445, %449 : vector<1x128xf32>
    %cst_140 = arith.constant 0.000000e+00 : f32
    %451 = vector.broadcast %cst_140 : f32 to vector<1x128xf32>
    %452 = arith.maximumf %450, %451 : vector<1x128xf32>
    %453 = tpu.concatenate %263, %290, %317, %344, %371, %398, %425, %452 in 0 : vector<1x128xf32>, vector<1x128xf32>, vector<1x128xf32>, vector<1x128xf32>, vector<1x128xf32>, vector<1x128xf32>, vector<1x128xf32>, vector<1x128xf32> -> vector<8x128xf32>
    %454 = arith.truncf %453 : vector<8x128xf32> to vector<8x128xbf16>
    %c0_141 = arith.constant 0 : index
    %c0_142 = arith.constant 0 : index
    %455 = vector.load %arg7[%c0_141, %c0_142] : memref<128x128xbf16, #tpu.memory_space<vmem>>, vector<128x128xbf16>
    %cst_143 = arith.constant dense<0.000000e+00> : vector<8x128xf32>
    %456 = tpu.matmul %454, %455, %cst_143 {dimension_numbers = #tpu.dot_dimension_numbers<[1], [0], [0], [1], [0, 0, 1, 1], [], []>} : vector<8x128xbf16>, vector<128x128xbf16>, vector<8x128xf32> -> vector<8x128xf32>
    %c0_144 = arith.constant 0 : index
    %c0_145 = arith.constant 0 : index
    %457 = vector.load %arg8[%c0_144, %c0_145] : memref<1x128xf32, #tpu.memory_space<vmem>>, vector<1x128xf32>
    %458 = vector.broadcast %457 : vector<1x128xf32> to vector<8x128xf32>
    %459 = arith.addf %456, %458 : vector<8x128xf32>
    %c0_146 = arith.constant 0 : index
    %c0_147 = arith.constant 0 : index
    %460 = vector.load %arg9[%c0_146, %c0_147] : memref<8x128xf32, #tpu.memory_space<vmem>>, vector<8x128xf32>
    tpu.vector_store %arg9[%c0_146, %c0_147], %459 {strides = array<i32>} : memref<8x128xf32, #tpu.memory_space<vmem>>, vector<8x128xf32>,
    return
  }
}

</mosaic_0001>

<llo_original>
// kernel: forward.1
$region0: #{forward.1}
  #allocation0 [shape = 'u32[]', space=smem, size = 0x4, offset = 0x4, fixed_abs, tag = 'smem constant byte address 0x4 - core index']
  #allocation1 [shape = 'u32[144,128]{1,0:T(1,128)}', space=vmem, size = 0x12000, scoped, tag = 'internal scratch']
  %s0 = inlined_call_operand.vmem [shape: bf16[8,128], index: 0, kind: input, shape index: {}]
  %s1 = inlined_call_operand.hbm [shape: bf16[128,256], index: 1, kind: input, shape index: {}]
  %s2 = inlined_call_operand.hbm [shape: bf16[128,256], index: 2, kind: input, shape index: {}]
  %s3 = inlined_call_operand.vmem [shape: f32[1,256], index: 3, kind: input, shape index: {}]
  %s4 = inlined_call_operand.hbm [shape: bf16[128,256], index: 4, kind: input, shape index: {}]
  %s5 = inlined_call_operand.hbm [shape: bf16[128,256], index: 5, kind: input, shape index: {}]
  %s6 = inlined_call_operand.vmem [shape: f32[1,256], index: 6, kind: input, shape index: {}]
  %s7 = inlined_call_operand.hbm [shape: bf16[128,128], index: 7, kind: input, shape index: {}]
  %s8 = inlined_call_operand.vmem [shape: f32[1,128], index: 8, kind: input, shape index: {}]
  %s9 = inlined_call_operand.vmem [shape: f32[8,128], index: 9, kind: output, shape index: {}]
  %s10 = sld [smem:[#allocation0]]
  $region66: #{forward.1} parent=0
    _
  %s12 = ssub.s32 1, %s10
  %s13 = scalar_select 0, %s12, %s10
  $region1: #{forward.1} parent=0
    #allocation2 [shape = 'u8[65536]{0}', space=vmem, size = 0x10000, scoped, tag = 'input window, operand 1, single buffered']
    #allocation3 [shape = 's32[1]{0}', space=sflag, size = 0x4, scoped, tag = 'scoped memory for forward.1']
    #allocation4 [shape = 'u8[65536]{0}', space=vmem, size = 0x10000, scoped, tag = 'input window, operand 2, single buffered']
    #allocation5 [shape = 's32[1]{0}', space=sflag, size = 0x4, scoped, tag = 'scoped memory for forward.1']
    #allocation6 [shape = 'u8[65536]{0}', space=vmem, size = 0x10000, scoped, tag = 'input window, operand 4, single buffered']
    #allocation7 [shape = 'u8[65536]{0}', space=vmem, size = 0x10000, scoped, tag = 'input window, operand 5, single buffered']
    #allocation8 [shape = 's32[1]{0}', space=sflag, size = 0x4, scoped, tag = 'scoped memory for forward.1']
    #allocation9 [shape = 'u8[32768]{0}', space=vmem, size = 0x8000, scoped, tag = 'input window, operand 7, single buffered']
    %14 = vsyncpa [#allocation3], 0
    %15 = vsyncpa [#allocation5], 0
    %16 = vsyncpa [#allocation8], 0
    // Predicated region
    $region2: #{forward.1} parent=1 // pred_check
      _
    $region3: #{forward.1} parent=1 // pred_check_branch
      %18 = sbr.rel (0) target = $region5
    $region4: #{forward.1} parent=1 // pred_region
      _
    $region5: #{forward.1} parent=1 // pred_fallthru
      _
    // Predicated region
    $region6: #{forward.1} parent=1 // pred_check
      _
    $region7: #{forward.1} parent=1 // pred_check_branch
      %20 = sbr.rel (0) target = $region9
    $region8: #{forward.1} parent=1 // pred_region
      %s22 = ssub.s32 2048, 2048
      %23 = vsyncadd [#allocation3], %s22
      %s24 = sshll.u32 [#allocation2], 4
      %s25 = int_to_ptr.vmem [resolvable:$true] %s24
      %30 = dma.hbm_to_vmem [thread:$0]  %s1, 2048, %s25, [#allocation3], 128, 128, 8
    $region9: #{forward.1} parent=1 // pred_fallthru
      _
    // Predicated region
    $region10: #{forward.1} parent=1 // pred_check
      _
    $region11: #{forward.1} parent=1 // pred_check_branch
      %32 = sbr.rel (0) target = $region13
    $region12: #{forward.1} parent=1 // pred_region
      %s34 = ssub.s32 2048, 2048
      %35 = vsyncadd [#allocation5], %s34
      %s36 = sshll.u32 [#allocation4], 4
      %s37 = int_to_ptr.vmem [resolvable:$true] %s36
      %42 = dma.hbm_to_vmem [thread:$0]  %s2, 2048, %s37, [#allocation5], 128, 128, 8
    $region13: #{forward.1} parent=1 // pred_fallthru
      _
    // Predicated region
    $region14: #{forward.1} parent=1 // pred_check
      _
    $region15: #{forward.1} parent=1 // pred_check_branch
      %44 = sbr.rel (0) target = $region17
    $region16: #{forward.1} parent=1 // pred_region
      _
    $region17: #{forward.1} parent=1 // pred_fallthru
      _
    // Predicated region
    $region18: #{forward.1} parent=1 // pred_check
      _
    $region19: #{forward.1} parent=1 // pred_check_branch
      %46 = sbr.rel (0) target = $region21
    $region20: #{forward.1} parent=1 // pred_region
      %s48 = ssub.s32 2048, 2048
      %49 = vsyncadd [#allocation5], %s48
      %s50 = sshll.u32 [#allocation6], 4
      %s51 = int_to_ptr.vmem [resolvable:$true] %s50
      %56 = dma.hbm_to_vmem [thread:$0]  %s4, 2048, %s51, [#allocation5], 128, 128, 8
    $region21: #{forward.1} parent=1 // pred_fallthru
      _
    // Predicated region
    $region22: #{forward.1} parent=1 // pred_check
      _
    $region23: #{forward.1} parent=1 // pred_check_branch
      %58 = sbr.rel (0) target = $region25
    $region24: #{forward.1} parent=1 // pred_region
      %s60 = ssub.s32 2048, 2048
      %61 = vsyncadd [#allocation8], %s60
      %s62 = sshll.u32 [#allocation7], 4
      %s63 = int_to_ptr.vmem [resolvable:$true] %s62
      %68 = dma.hbm_to_vmem [thread:$0]  %s5, 2048, %s63, [#allocation8], 128, 128, 8
    $region25: #{forward.1} parent=1 // pred_fallthru
      _
    // Predicated region
    $region26: #{forward.1} parent=1 // pred_check
      _
    $region27: #{forward.1} parent=1 // pred_check_branch
      %70 = sbr.rel (0) target = $region29
    $region28: #{forward.1} parent=1 // pred_region
      _
    $region29: #{forward.1} parent=1 // pred_fallthru
      _
    // Predicated region
    $region30: #{forward.1} parent=1 // pred_check
      _
    $region31: #{forward.1} parent=1 // pred_check_branch
      %72 = sbr.rel (0) target = $region33
    $region32: #{forward.1} parent=1 // pred_region
      %s74 = ssub.s32 1024, 1024
      %75 = vsyncadd [#allocation8], %s74
      %s76 = sshll.u32 [#allocation9], 4
      %s77 = int_to_ptr.vmem [resolvable:$true] %s76
      %82 = dma.hbm_to_vmem [thread:$0]  %s7, 1024, %s77, [#allocation8], 64, 64, 4
    $region33: #{forward.1} parent=1 // pred_fallthru
      _
    // Predicated region
    $region34: #{forward.1} parent=1 // pred_check
      _
    $region35: #{forward.1} parent=1 // pred_check_branch
      %84 = sbr.rel (0) target = $region37
    $region36: #{forward.1} parent=1 // pred_region
      _
    $region37: #{forward.1} parent=1 // pred_fallthru
      _
    // Predicated region
    $region38: #{forward.1} parent=1 // pred_check
      _
    $region39: #{forward.1} parent=1 // pred_check_branch
      %86 = sbr.rel (0) target = $region41
    $region40: #{forward.1} parent=1 // pred_region
      %87 = dma.done [#allocation3], 2048
    $region41: #{forward.1} parent=1 // pred_fallthru
      _
    // Predicated region
    $region42: #{forward.1} parent=1 // pred_check
      _
    $region43: #{forward.1} parent=1 // pred_check_branch
      %89 = sbr.rel (0) target = $region45
    $region44: #{forward.1} parent=1 // pred_region
      %90 = dma.done [#allocation5], 2048
    $region45: #{forward.1} parent=1 // pred_fallthru
      _
    // Predicated region
    $region46: #{forward.1} parent=1 // pred_check
      _
    $region47: #{forward.1} parent=1 // pred_check_branch
      %92 = sbr.rel (0) target = $region49
    $region48: #{forward.1} parent=1 // pred_region
      %93 = dma.done [#allocation5], 2048
    $region49: #{forward.1} parent=1 // pred_fallthru
      _
    // Predicated region
    $region50: #{forward.1} parent=1 // pred_check
      _
    $region51: #{forward.1} parent=1 // pred_check_branch
      %95 = sbr.rel (0) target = $region53
    $region52: #{forward.1} parent=1 // pred_region
      %96 = dma.done [#allocation8], 2048
    $region53: #{forward.1} parent=1 // pred_fallthru
      _
    // Predicated region
    $region54: #{forward.1} parent=1 // pred_check
      _
    $region55: #{forward.1} parent=1 // pred_check_branch
      %98 = sbr.rel (0) target = $region57
    $region56: #{forward.1} parent=1 // pred_region
      %99 = dma.done [#allocation8], 1024
    $region57: #{forward.1} parent=1 // pred_fallthru
      _
    %v101 = vlaneseq
    %v102 = vand.u32 %v101, 127
    %v103 = vld [vmem:[%s0] sm:$0xf]
    %v104 = vld [vmem:[#allocation2] sm:$0xff]
    %v105 = vld [vmem:[#allocation2 + $0x8] sm:$0xff]
    %v106 = vld [vmem:[#allocation2 + $0x10] sm:$0xff]
    %v107 = vld [vmem:[#allocation2 + $0x18] sm:$0xff]
    %v108 = vld [vmem:[#allocation2 + $0x20] sm:$0xff]
    %v109 = vld [vmem:[#allocation2 + $0x28] sm:$0xff]
    %v110 = vld [vmem:[#allocation2 + $0x30] sm:$0xff]
    %v111 = vld [vmem:[#allocation2 + $0x38] sm:$0xff]
    %v112 = vld [vmem:[#allocation2 + $0x40] sm:$0xff]
    %v113 = vld [vmem:[#allocation2 + $0x48] sm:$0xff]
    %v114 = vld [vmem:[#allocation2 + $0x50] sm:$0xff]
    %v115 = vld [vmem:[#allocation2 + $0x58] sm:$0xff]
    %v116 = vld [vmem:[#allocation2 + $0x60] sm:$0xff]
    %v117 = vld [vmem:[#allocation2 + $0x68] sm:$0xff]
    %v118 = vld [vmem:[#allocation2 + $0x70] sm:$0xff]
    %v119 = vld [vmem:[#allocation2 + $0x78] sm:$0xff]
    %v120 = vld [vmem:[%s3] sm:$0x3]
    %v122 = vlaneseq
    %v123 = vshrl.u32 %v122, 7
    %v124 = vsub.s32 0, %v123
    %v125 = vrot.slane %v120, %v124
    %v126 = vlaneseq
    %v127 = vshrl.u32 %v126, 7
    %v128 = vsub.s32 1, %v127
    %v129 = vrot.slane %v120, %v128
    %v148 = vunpack.c.l.b16 %v104
    %v149 = vunpack.c.h.b16 %v104
    %v150 = vunpack.c.l.b16 %v105
    %v151 = vunpack.c.h.b16 %v105
    %v152 = vunpack.c.l.b16 %v106
    %v153 = vunpack.c.h.b16 %v106
    %v154 = vunpack.c.l.b16 %v107
    %v155 = vunpack.c.h.b16 %v107
    %v156 = vunpack.c.l.b16 %v108
    %v157 = vunpack.c.h.b16 %v108
    %v158 = vunpack.c.l.b16 %v109
    %v159 = vunpack.c.h.b16 %v109
    %v160 = vunpack.c.l.b16 %v110
    %v161 = vunpack.c.h.b16 %v110
    %v162 = vunpack.c.l.b16 %v111
    %v163 = vunpack.c.h.b16 %v111
    %v164 = vunpack.c.l.b16 %v112
    %v165 = vunpack.c.h.b16 %v112
    %v166 = vunpack.c.l.b16 %v113
    %v167 = vunpack.c.h.b16 %v113
    %v168 = vunpack.c.l.b16 %v114
    %v169 = vunpack.c.h.b16 %v114
    %v170 = vunpack.c.l.b16 %v115
    %v171 = vunpack.c.h.b16 %v115
    %v172 = vunpack.c.l.b16 %v116
    %v173 = vunpack.c.h.b16 %v116
    %v174 = vunpack.c.l.b16 %v117
    %v175 = vunpack.c.h.b16 %v117
    %v176 = vunpack.c.l.b16 %v118
    %v177 = vunpack.c.h.b16 %v118
    %v178 = vunpack.c.l.b16 %v119
    %v179 = vunpack.c.h.b16 %v119
    %v180 = vpack.c.b16 %v150, %v148
    %v181 = vpack.c.b16 %v151, %v149
    %v182 = vpack.c.b16 %v154, %v152
    %v183 = vpack.c.b16 %v155, %v153
    %v184 = vpack.c.b16 %v158, %v156
    %v185 = vpack.c.b16 %v159, %v157
    %v186 = vpack.c.b16 %v162, %v160
    %v187 = vpack.c.b16 %v163, %v161
    %v188 = vpack.c.b16 %v166, %v164
    %v189 = vpack.c.b16 %v167, %v165
    %v190 = vpack.c.b16 %v170, %v168
    %v191 = vpack.c.b16 %v171, %v169
    %v192 = vpack.c.b16 %v174, %v172
    %v193 = vpack.c.b16 %v175, %v173
    %v194 = vpack.c.b16 %v178, %v176
    %v195 = vpack.c.b16 %v179, %v177
    %212 = vmatprep.subr.bf16.mxu0 %v195
    %213 = vmatpush1.bf16.msra.mxu0 %v194
    %214 = vmatprep.subr.bf16.mxu0 %v193
    %215 = vmatpush1.bf16.msra.mxu0 %v192
    %216 = vmatprep.subr.bf16.mxu0 %v191
    %217 = vmatpush1.bf16.msra.mxu0 %v190
    %218 = vmatprep.subr.bf16.mxu0 %v189
    %219 = vmatpush1.bf16.msra.mxu0 %v188
    %220 = vmatprep.subr.bf16.mxu0 %v187
    %221 = vmatpush1.bf16.msra.mxu0 %v186
    %222 = vmatprep.subr.bf16.mxu0 %v185
    %223 = vmatpush1.bf16.msra.mxu0 %v184
    %224 = vmatprep.subr.bf16.mxu0 %v183
    %225 = vmatpush1.bf16.msra.mxu0 %v182
    %226 = vmatprep.subr.bf16.mxu0 %v181
    %227 = vmatpush1.bf16.msra.mxu0 %v180
    %228 = vmatprep.subr.bf16.mxu0 0
    %229 = vmatpush2.bf16.msra.mxu0 0
    %230 = vmatprep.subr.bf16.mxu0 0
    %231 = vmatpush2.bf16.msra.mxu0 0
    %232 = vmatprep.subr.bf16.mxu0 0
    %233 = vmatpush2.bf16.msra.mxu0 0
    %234 = vmatprep.subr.bf16.mxu0 0
    %235 = vmatpush2.bf16.msra.mxu0 0
    %236 = vmatprep.subr.bf16.mxu0 0
    %237 = vmatpush2.bf16.msra.mxu0 0
    %238 = vmatprep.subr.bf16.mxu0 0
    %239 = vmatpush2.bf16.msra.mxu0 0
    %240 = vmatprep.subr.bf16.mxu0 0
    %241 = vmatpush2.bf16.msra.mxu0 0
    %242 = vmatprep.subr.bf16.mxu0 0
    %243 = vmatpush2.bf16.msra.mxu0 0
    %244 = vmatprep.mubr.bf16.mxu0 0
    %245 = vmatmul.mubr.bf16.gmra.mxu0 %v103
    %v246 = vpop.f32.mrf.mxu0
    %v247 = vadd.f32 %v125, %v246
    %v248 = vpop.f32.mrf.mxu0
    %v249 = vadd.f32 %v129, %v248
    %v250 = vpop.f32.mrf.mxu0
    %v251 = vpop.f32.mrf.mxu0
    %252 = vdwg.mxu0
    %v253 = vld [vmem:[#allocation4] sm:$0xff]
    %v254 = vld [vmem:[#allocation4 + $0x8] sm:$0xff]
    %v255 = vld [vmem:[#allocation4 + $0x10] sm:$0xff]
    %v256 = vld [vmem:[#allocation4 + $0x18] sm:$0xff]
    %v257 = vld [vmem:[#allocation4 + $0x20] sm:$0xff]
    %v258 = vld [vmem:[#allocation4 + $0x28] sm:$0xff]
    %v259 = vld [vmem:[#allocation4 + $0x30] sm:$0xff]
    %v260 = vld [vmem:[#allocation4 + $0x38] sm:$0xff]
    %v261 = vld [vmem:[#allocation4 + $0x40] sm:$0xff]
    %v262 = vld [vmem:[#allocation4 + $0x48] sm:$0xff]
    %v263 = vld [vmem:[#allocation4 + $0x50] sm:$0xff]
    %v264 = vld [vmem:[#allocation4 + $0x58] sm:$0xff]
    %v265 = vld [vmem:[#allocation4 + $0x60] sm:$0xff]
    %v266 = vld [vmem:[#allocation4 + $0x68] sm:$0xff]
    %v267 = vld [vmem:[#allocation4 + $0x70] sm:$0xff]
    %v268 = vld [vmem:[#allocation4 + $0x78] sm:$0xff]
    %v285 = vunpack.c.l.b16 %v253
    %v286 = vunpack.c.h.b16 %v253
    %v287 = vunpack.c.l.b16 %v254
    %v288 = vunpack.c.h.b16 %v254
    %v289 = vunpack.c.l.b16 %v255
    %v290 = vunpack.c.h.b16 %v255
    %v291 = vunpack.c.l.b16 %v256
    %v292 = vunpack.c.h.b16 %v256
    %v293 = vunpack.c.l.b16 %v257
    %v294 = vunpack.c.h.b16 %v257
    %v295 = vunpack.c.l.b16 %v258
    %v296 = vunpack.c.h.b16 %v258
    %v297 = vunpack.c.l.b16 %v259
    %v298 = vunpack.c.h.b16 %v259
    %v299 = vunpack.c.l.b16 %v260
    %v300 = vunpack.c.h.b16 %v260
    %v301 = vunpack.c.l.b16 %v261
    %v302 = vunpack.c.h.b16 %v261
    %v303 = vunpack.c.l.b16 %v262
    %v304 = vunpack.c.h.b16 %v262
    %v305 = vunpack.c.l.b16 %v263
    %v306 = vunpack.c.h.b16 %v263
    %v307 = vunpack.c.l.b16 %v264
    %v308 = vunpack.c.h.b16 %v264
    %v309 = vunpack.c.l.b16 %v265
    %v310 = vunpack.c.h.b16 %v265
    %v311 = vunpack.c.l.b16 %v266
    %v312 = vunpack.c.h.b16 %v266
    %v313 = vunpack.c.l.b16 %v267
    %v314 = vunpack.c.h.b16 %v267
    %v315 = vunpack.c.l.b16 %v268
    %v316 = vunpack.c.h.b16 %v268
    %v317 = vpack.c.b16 %v287, %v285
    %v318 = vpack.c.b16 %v288, %v286
    %v319 = vpack.c.b16 %v291, %v289
    %v320 = vpack.c.b16 %v292, %v290
    %v321 = vpack.c.b16 %v295, %v293
    %v322 = vpack.c.b16 %v296, %v294
    %v323 = vpack.c.b16 %v299, %v297
    %v324 = vpack.c.b16 %v300, %v298
    %v325 = vpack.c.b16 %v303, %v301
    %v326 = vpack.c.b16 %v304, %v302
    %v327 = vpack.c.b16 %v307, %v305
    %v328 = vpack.c.b16 %v308, %v306
    %v329 = vpack.c.b16 %v311, %v309
    %v330 = vpack.c.b16 %v312, %v310
    %v331 = vpack.c.b16 %v315, %v313
    %v332 = vpack.c.b16 %v316, %v314
    %349 = vmatprep.subr.bf16.mxu0 %v332
    %350 = vmatpush1.bf16.msra.mxu0 %v331
    %351 = vmatprep.subr.bf16.mxu0 %v330
    %352 = vmatpush1.bf16.msra.mxu0 %v329
    %353 = vmatprep.subr.bf16.mxu0 %v328
    %354 = vmatpush1.bf16.msra.mxu0 %v327
    %355 = vmatprep.subr.bf16.mxu0 %v326
    %356 = vmatpush1.bf16.msra.mxu0 %v325
    %357 = vmatprep.subr.bf16.mxu0 %v324
    %358 = vmatpush1.bf16.msra.mxu0 %v323
    %359 = vmatprep.subr.bf16.mxu0 %v322
    %360 = vmatpush1.bf16.msra.mxu0 %v321
    %361 = vmatprep.subr.bf16.mxu0 %v320
    %362 = vmatpush1.bf16.msra.mxu0 %v319
    %363 = vmatprep.subr.bf16.mxu0 %v318
    %364 = vmatpush1.bf16.msra.mxu0 %v317
    %365 = vmatprep.subr.bf16.mxu0 0
    %366 = vmatpush2.bf16.msra.mxu0 0
    %367 = vmatprep.subr.bf16.mxu0 0
    %368 = vmatpush2.bf16.msra.mxu0 0
    %369 = vmatprep.subr.bf16.mxu0 0
    %370 = vmatpush2.bf16.msra.mxu0 0
    %371 = vmatprep.subr.bf16.mxu0 0
    %372 = vmatpush2.bf16.msra.mxu0 0
    %373 = vmatprep.subr.bf16.mxu0 0
    %374 = vmatpush2.bf16.msra.mxu0 0
    %375 = vmatprep.subr.bf16.mxu0 0
    %376 = vmatpush2.bf16.msra.mxu0 0
    %377 = vmatprep.subr.bf16.mxu0 0
    %378 = vmatpush2.bf16.msra.mxu0 0
    %379 = vmatprep.subr.bf16.mxu0 0
    %380 = vmatpush2.bf16.msra.mxu0 0
    %381 = vmatprep.mubr.bf16.mxu0 0
    %382 = vmatmul.mubr.bf16.gmra.mxu0 0
    %v383 = vpop.f32.mrf.mxu0
    %v384 = vadd.f32 0.0, %v383
    %v385 = vpop.f32.mrf.mxu0
    %v386 = vadd.f32 0.0, %v385
    %v387 = vpop.f32.mrf.mxu0
    %v388 = vpop.f32.mrf.mxu0
    %389 = vdwg.mxu0
    %v390 = vadd.f32 %v247, %v384
    %v391 = vadd.f32 %v249, %v386
    %v392 = vxor.u32 %v390, 2147483648
    %v393 = vmul.f32 %v392, 1.442695
    %v394 = vpow.pop %v393
    %v395 = vadd.f32 %v394, 1.0
    %v396 = vrcp.pop %v395
    %v397 = vmul.f32 1.0, %v396
    %v398 = vtanh.pop %v391
    %v399 = vxor.u32 %v391, 2147483648
    %v400 = vmul.f32 %v399, 1.442695
    %v401 = vpow.pop %v400
    %v402 = vadd.f32 %v401, 1.0
    %v403 = vrcp.pop %v402
    %v404 = vmul.f32 1.0, %v403
    %405 = vrot.lane.b32.xlu0 %v397, 64
    %v406 = vpop.permute.xlu0 %405
    %407 = vrot.lane.b32.xlu0 %v404, 64
    %v408 = vpop.permute.xlu0 %407
    %v409 = vmul.f32 %v406, 0.0
    %v410 = vmul.f32 %v397, %v398
    %v411 = vadd.f32 %v409, %v410
    %v412 = vtanh.pop %v411
    %v413 = vmul.f32 %v408, %v412
    %v414 = vmax.f32 %v413, 0.0
    %v415 = vpack.c.bf16 %v413, %v413
    %416 = vmatprep.subr.bf16.mxu0 %v332
    %417 = vmatpush1.bf16.msra.mxu0 %v331
    %418 = vmatprep.subr.bf16.mxu0 %v330
    %419 = vmatpush1.bf16.msra.mxu0 %v329
    %420 = vmatprep.subr.bf16.mxu0 %v328
    %421 = vmatpush1.bf16.msra.mxu0 %v327
    %422 = vmatprep.subr.bf16.mxu0 %v326
    %423 = vmatpush1.bf16.msra.mxu0 %v325
    %424 = vmatprep.subr.bf16.mxu0 %v324
    %425 = vmatpush1.bf16.msra.mxu0 %v323
    %426 = vmatprep.subr.bf16.mxu0 %v322
    %427 = vmatpush1.bf16.msra.mxu0 %v321
    %428 = vmatprep.subr.bf16.mxu0 %v320
    %429 = vmatpush1.bf16.msra.mxu0 %v319
    %430 = vmatprep.subr.bf16.mxu0 %v318
    %431 = vmatpush1.bf16.msra.mxu0 %v317
    %432 = vmatprep.subr.bf16.mxu0 0
    %433 = vmatpush2.bf16.msra.mxu0 0
    %434 = vmatprep.subr.bf16.mxu0 0
    %435 = vmatpush2.bf16.msra.mxu0 0
    %436 = vmatprep.subr.bf16.mxu0 0
    %437 = vmatpush2.bf16.msra.mxu0 0
    %438 = vmatprep.subr.bf16.mxu0 0
    %439 = vmatpush2.bf16.msra.mxu0 0
    %440 = vmatprep.subr.bf16.mxu0 0
    %441 = vmatpush2.bf16.msra.mxu0 0
    %442 = vmatprep.subr.bf16.mxu0 0
    %443 = vmatpush2.bf16.msra.mxu0 0
    %444 = vmatprep.subr.bf16.mxu0 0
    %445 = vmatpush2.bf16.msra.mxu0 0
    %446 = vmatprep.subr.bf16.mxu0 0
    %447 = vmatpush2.bf16.msra.mxu0 0
    %448 = vmatprep.mubr.bf16.mxu0 0
    %449 = vmatmul.mubr.bf16.gmra.mxu0 %v415
    %v450 = vpop.f32.mrf.mxu0
    %v451 = vadd.f32 0.0, %v450
    %v452 = vpop.f32.mrf.mxu0
    %v453 = vadd.f32 0.0, %v452
    %v454 = vpop.f32.mrf.mxu0
    %v455 = vpop.f32.mrf.mxu0
    %456 = vdwg.mxu0
    %v459 = vrot.slane %v451, 7
    %v460 = vrot.slane %v453, 7
    %v463 = vadd.f32 %v247, %v459
    %v464 = vadd.f32 %v249, %v460
    %v465 = vxor.u32 %v463, 2147483648
    %v466 = vmul.f32 %v465, 1.442695
    %v467 = vpow.pop %v466
    %v468 = vadd.f32 %v467, 1.0
    %v469 = vrcp.pop %v468
    %v470 = vmul.f32 1.0, %v469
    %v471 = vtanh.pop %v464
    %v472 = vxor.u32 %v464, 2147483648
    %v473 = vmul.f32 %v472, 1.442695
    %v474 = vpow.pop %v473
    %v475 = vadd.f32 %v474, 1.0
    %v476 = vrcp.pop %v475
    %v477 = vmul.f32 1.0, %v476
    %v479 = vrot.slane %v470, 1
    %481 = vrot.lane.b32.xlu0 %v479, 64
    %v482 = vpop.permute.xlu0 %481
    %v484 = vrot.slane %v477, 1
    %486 = vrot.lane.b32.xlu0 %v484, 64
    %v487 = vpop.permute.xlu0 %486
    %v488 = vmul.f32 %v482, %v411
    %v489 = vmul.f32 %v470, %v471
    %v491 = vrot.slane %v489, 1
    %v493 = vadd.f32 %v488, %v491
    %v494 = vtanh.pop %v493
    %v495 = vmul.f32 %v487, %v494
    %v496 = vmax.f32 %v495, 0.0
    %v497 = vpack.c.bf16 %v495, %v495
    %498 = vmatprep.subr.bf16.mxu0 %v332
    %499 = vmatpush1.bf16.msra.mxu0 %v331
    %500 = vmatprep.subr.bf16.mxu0 %v330
    %501 = vmatpush1.bf16.msra.mxu0 %v329
    %502 = vmatprep.subr.bf16.mxu0 %v328
    %503 = vmatpush1.bf16.msra.mxu0 %v327
    %504 = vmatprep.subr.bf16.mxu0 %v326
    %505 = vmatpush1.bf16.msra.mxu0 %v325
    %506 = vmatprep.subr.bf16.mxu0 %v324
    %507 = vmatpush1.bf16.msra.mxu0 %v323
    %508 = vmatprep.subr.bf16.mxu0 %v322
    %509 = vmatpush1.bf16.msra.mxu0 %v321
    %510 = vmatprep.subr.bf16.mxu0 %v320
    %511 = vmatpush1.bf16.msra.mxu0 %v319
    %512 = vmatprep.subr.bf16.mxu0 %v318
    %513 = vmatpush1.bf16.msra.mxu0 %v317
    %514 = vmatprep.subr.bf16.mxu0 0
    %515 = vmatpush2.bf16.msra.mxu0 0
    %516 = vmatprep.subr.bf16.mxu0 0
    %517 = vmatpush2.bf16.msra.mxu0 0
    %518 = vmatprep.subr.bf16.mxu0 0
    %519 = vmatpush2.bf16.msra.mxu0 0
    %520 = vmatprep.subr.bf16.mxu0 0
    %521 = vmatpush2.bf16.msra.mxu0 0
    %522 = vmatprep.subr.bf16.mxu0 0
    %523 = vmatpush2.bf16.msra.mxu0 0
    %524 = vmatprep.subr.bf16.mxu0 0
    %525 = vmatpush2.bf16.msra.mxu0 0
    %526 = vmatprep.subr.bf16.mxu0 0
    %527 = vmatpush2.bf16.msra.mxu0 0
    %528 = vmatprep.subr.bf16.mxu0 0
    %529 = vmatpush2.bf16.msra.mxu0 0
    %530 = vmatprep.mubr.bf16.mxu0 0
    %531 = vmatmul.mubr.bf16.gmra.mxu0 %v497
    %v532 = vpop.f32.mrf.mxu0
    %v533 = vadd.f32 0.0, %v532
    %v534 = vpop.f32.mrf.mxu0
    %v535 = vadd.f32 0.0, %v534
    %v536 = vpop.f32.mrf.mxu0
    %v537 = vpop.f32.mrf.mxu0
    %538 = vdwg.mxu0
    %v541 = vrot.slane %v533, 6
    %v542 = vrot.slane %v535, 6
    %v545 = vadd.f32 %v247, %v541
    %v546 = vadd.f32 %v249, %v542
    %v547 = vxor.u32 %v545, 2147483648
    %v548 = vmul.f32 %v547, 1.442695
    %v549 = vpow.pop %v548
    %v550 = vadd.f32 %v549, 1.0
    %v551 = vrcp.pop %v550
    %v552 = vmul.f32 1.0, %v551
    %v553 = vtanh.pop %v546
    %v554 = vxor.u32 %v546, 2147483648
    %v555 = vmul.f32 %v554, 1.442695
    %v556 = vpow.pop %v555
    %v557 = vadd.f32 %v556, 1.0
    %v558 = vrcp.pop %v557
    %v559 = vmul.f32 1.0, %v558
    %v561 = vrot.slane %v552, 2
    %563 = vrot.lane.b32.xlu0 %v561, 64
    %v564 = vpop.permute.xlu0 %563
    %v566 = vrot.slane %v559, 2
    %568 = vrot.lane.b32.xlu0 %v566, 64
    %v569 = vpop.permute.xlu0 %568
    %v570 = vmul.f32 %v564, %v493
    %v571 = vmul.f32 %v552, %v553
    %v573 = vrot.slane %v571, 2
    %v575 = vadd.f32 %v570, %v573
    %v576 = vtanh.pop %v575
    %v577 = vmul.f32 %v569, %v576
    %v578 = vmax.f32 %v577, 0.0
    %v579 = vpack.c.bf16 %v577, %v577
    %580 = vmatprep.subr.bf16.mxu0 %v332
    %581 = vmatpush1.bf16.msra.mxu0 %v331
    %582 = vmatprep.subr.bf16.mxu0 %v330
    %583 = vmatpush1.bf16.msra.mxu0 %v329
    %584 = vmatprep.subr.bf16.mxu0 %v328
    %585 = vmatpush1.bf16.msra.mxu0 %v327
    %586 = vmatprep.subr.bf16.mxu0 %v326
    %587 = vmatpush1.bf16.msra.mxu0 %v325
    %588 = vmatprep.subr.bf16.mxu0 %v324
    %589 = vmatpush1.bf16.msra.mxu0 %v323
    %590 = vmatprep.subr.bf16.mxu0 %v322
    %591 = vmatpush1.bf16.msra.mxu0 %v321
    %592 = vmatprep.subr.bf16.mxu0 %v320
    %593 = vmatpush1.bf16.msra.mxu0 %v319
    %594 = vmatprep.subr.bf16.mxu0 %v318
    %595 = vmatpush1.bf16.msra.mxu0 %v317
    %596 = vmatprep.subr.bf16.mxu0 0
    %597 = vmatpush2.bf16.msra.mxu0 0
    %598 = vmatprep.subr.bf16.mxu0 0
    %599 = vmatpush2.bf16.msra.mxu0 0
    %600 = vmatprep.subr.bf16.mxu0 0
    %601 = vmatpush2.bf16.msra.mxu0 0
    %602 = vmatprep.subr.bf16.mxu0 0
    %603 = vmatpush2.bf16.msra.mxu0 0
    %604 = vmatprep.subr.bf16.mxu0 0
    %605 = vmatpush2.bf16.msra.mxu0 0
    %606 = vmatprep.subr.bf16.mxu0 0
    %607 = vmatpush2.bf16.msra.mxu0 0
    %608 = vmatprep.subr.bf16.mxu0 0
    %609 = vmatpush2.bf16.msra.mxu0 0
    %610 = vmatprep.subr.bf16.mxu0 0
    %611 = vmatpush2.bf16.msra.mxu0 0
    %612 = vmatprep.mubr.bf16.mxu0 0
    %613 = vmatmul.mubr.bf16.gmra.mxu0 %v579
    %v614 = vpop.f32.mrf.mxu0
    %v615 = vadd.f32 0.0, %v614
    %v616 = vpop.f32.mrf.mxu0
    %v617 = vadd.f32 0.0, %v616
    %v618 = vpop.f32.mrf.mxu0
    %v619 = vpop.f32.mrf.mxu0
    %620 = vdwg.mxu0
    %v623 = vrot.slane %v615, 5
    %v624 = vrot.slane %v617, 5
    %v627 = vadd.f32 %v247, %v623
    %v628 = vadd.f32 %v249, %v624
    %v629 = vxor.u32 %v627, 2147483648
    %v630 = vmul.f32 %v629, 1.442695
    %v631 = vpow.pop %v630
    %v632 = vadd.f32 %v631, 1.0
    %v633 = vrcp.pop %v632
    %v634 = vmul.f32 1.0, %v633
    %v635 = vtanh.pop %v628
    %v636 = vxor.u32 %v628, 2147483648
    %v637 = vmul.f32 %v636, 1.442695
    %v638 = vpow.pop %v637
    %v639 = vadd.f32 %v638, 1.0
    %v640 = vrcp.pop %v639
    %v641 = vmul.f32 1.0, %v640
    %v643 = vrot.slane %v634, 3
    %645 = vrot.lane.b32.xlu0 %v643, 64
    %v646 = vpop.permute.xlu0 %645
    %v648 = vrot.slane %v641, 3
    %650 = vrot.lane.b32.xlu0 %v648, 64
    %v651 = vpop.permute.xlu0 %650
    %v652 = vmul.f32 %v646, %v575
    %v653 = vmul.f32 %v634, %v635
    %v655 = vrot.slane %v653, 3
    %v657 = vadd.f32 %v652, %v655
    %v658 = vtanh.pop %v657
    %v659 = vmul.f32 %v651, %v658
    %v660 = vmax.f32 %v659, 0.0
    %v661 = vpack.c.bf16 %v659, %v659
    %662 = vmatprep.subr.bf16.mxu0 %v332
    %663 = vmatpush1.bf16.msra.mxu0 %v331
    %664 = vmatprep.subr.bf16.mxu0 %v330
    %665 = vmatpush1.bf16.msra.mxu0 %v329
    %666 = vmatprep.subr.bf16.mxu0 %v328
    %667 = vmatpush1.bf16.msra.mxu0 %v327
    %668 = vmatprep.subr.bf16.mxu0 %v326
    %669 = vmatpush1.bf16.msra.mxu0 %v325
    %670 = vmatprep.subr.bf16.mxu0 %v324
    %671 = vmatpush1.bf16.msra.mxu0 %v323
    %672 = vmatprep.subr.bf16.mxu0 %v322
    %673 = vmatpush1.bf16.msra.mxu0 %v321
    %674 = vmatprep.subr.bf16.mxu0 %v320
    %675 = vmatpush1.bf16.msra.mxu0 %v319
    %676 = vmatprep.subr.bf16.mxu0 %v318
    %677 = vmatpush1.bf16.msra.mxu0 %v317
    %678 = vmatprep.subr.bf16.mxu0 0
    %679 = vmatpush2.bf16.msra.mxu0 0
    %680 = vmatprep.subr.bf16.mxu0 0
    %681 = vmatpush2.bf16.msra.mxu0 0
    %682 = vmatprep.subr.bf16.mxu0 0
    %683 = vmatpush2.bf16.msra.mxu0 0
    %684 = vmatprep.subr.bf16.mxu0 0
    %685 = vmatpush2.bf16.msra.mxu0 0
    %686 = vmatprep.subr.bf16.mxu0 0
    %687 = vmatpush2.bf16.msra.mxu0 0
    %688 = vmatprep.subr.bf16.mxu0 0
    %689 = vmatpush2.bf16.msra.mxu0 0
    %690 = vmatprep.subr.bf16.mxu0 0
    %691 = vmatpush2.bf16.msra.mxu0 0
    %692 = vmatprep.subr.bf16.mxu0 0
    %693 = vmatpush2.bf16.msra.mxu0 0
    %694 = vmatprep.mubr.bf16.mxu0 0
    %695 = vmatmul.mubr.bf16.gmra.mxu0 %v661
    %v696 = vpop.f32.mrf.mxu0
    %v697 = vadd.f32 0.0, %v696
    %v698 = vpop.f32.mrf.mxu0
    %v699 = vadd.f32 0.0, %v698
    %v700 = vpop.f32.mrf.mxu0
    %v701 = vpop.f32.mrf.mxu0
    %702 = vdwg.mxu0
    %v705 = vrot.slane %v697, 4
    %v706 = vrot.slane %v699, 4
    %v709 = vadd.f32 %v247, %v705
    %v710 = vadd.f32 %v249, %v706
    %v711 = vxor.u32 %v709, 2147483648
    %v712 = vmul.f32 %v711, 1.442695
    %v713 = vpow.pop %v712
    %v714 = vadd.f32 %v713, 1.0
    %v715 = vrcp.pop %v714
    %v716 = vmul.f32 1.0, %v715
    %v717 = vtanh.pop %v710
    %v718 = vxor.u32 %v710, 2147483648
    %v719 = vmul.f32 %v718, 1.442695
    %v720 = vpow.pop %v719
    %v721 = vadd.f32 %v720, 1.0
    %v722 = vrcp.pop %v721
    %v723 = vmul.f32 1.0, %v722
    %v725 = vrot.slane %v716, 4
    %727 = vrot.lane.b32.xlu0 %v725, 64
    %v728 = vpop.permute.xlu0 %727
    %v730 = vrot.slane %v723, 4
    %732 = vrot.lane.b32.xlu0 %v730, 64
    %v733 = vpop.permute.xlu0 %732
    %v734 = vmul.f32 %v728, %v657
    %v735 = vmul.f32 %v716, %v717
    %v737 = vrot.slane %v735, 4
    %v739 = vadd.f32 %v734, %v737
    %v740 = vtanh.pop %v739
    %v741 = vmul.f32 %v733, %v740
    %v742 = vmax.f32 %v741, 0.0
    %v743 = vpack.c.bf16 %v741, %v741
    %744 = vmatprep.subr.bf16.mxu0 %v332
    %745 = vmatpush1.bf16.msra.mxu0 %v331
    %746 = vmatprep.subr.bf16.mxu0 %v330
    %747 = vmatpush1.bf16.msra.mxu0 %v329
    %748 = vmatprep.subr.bf16.mxu0 %v328
    %749 = vmatpush1.bf16.msra.mxu0 %v327
    %750 = vmatprep.subr.bf16.mxu0 %v326
    %751 = vmatpush1.bf16.msra.mxu0 %v325
    %752 = vmatprep.subr.bf16.mxu0 %v324
    %753 = vmatpush1.bf16.msra.mxu0 %v323
    %754 = vmatprep.subr.bf16.mxu0 %v322
    %755 = vmatpush1.bf16.msra.mxu0 %v321
    %756 = vmatprep.subr.bf16.mxu0 %v320
    %757 = vmatpush1.bf16.msra.mxu0 %v319
    %758 = vmatprep.subr.bf16.mxu0 %v318
    %759 = vmatpush1.bf16.msra.mxu0 %v317
    %760 = vmatprep.subr.bf16.mxu0 0
    %761 = vmatpush2.bf16.msra.mxu0 0
    %762 = vmatprep.subr.bf16.mxu0 0
    %763 = vmatpush2.bf16.msra.mxu0 0
    %764 = vmatprep.subr.bf16.mxu0 0
    %765 = vmatpush2.bf16.msra.mxu0 0
    %766 = vmatprep.subr.bf16.mxu0 0
    %767 = vmatpush2.bf16.msra.mxu0 0
    %768 = vmatprep.subr.bf16.mxu0 0
    %769 = vmatpush2.bf16.msra.mxu0 0
    %770 = vmatprep.subr.bf16.mxu0 0
    %771 = vmatpush2.bf16.msra.mxu0 0
    %772 = vmatprep.subr.bf16.mxu0 0
    %773 = vmatpush2.bf16.msra.mxu0 0
    %774 = vmatprep.subr.bf16.mxu0 0
    %775 = vmatpush2.bf16.msra.mxu0 0
    %776 = vmatprep.mubr.bf16.mxu0 0
    %777 = vmatmul.mubr.bf16.gmra.mxu0 %v743
    %v778 = vpop.f32.mrf.mxu0
    %v779 = vadd.f32 0.0, %v778
    %v780 = vpop.f32.mrf.mxu0
    %v781 = vadd.f32 0.0, %v780
    %v782 = vpop.f32.mrf.mxu0
    %v783 = vpop.f32.mrf.mxu0
    %784 = vdwg.mxu0
    %v787 = vrot.slane %v779, 3
    %v788 = vrot.slane %v781, 3
    %v791 = vadd.f32 %v247, %v787
    %v792 = vadd.f32 %v249, %v788
    %v793 = vxor.u32 %v791, 2147483648
    %v794 = vmul.f32 %v793, 1.442695
    %v795 = vpow.pop %v794
    %v796 = vadd.f32 %v795, 1.0
    %v797 = vrcp.pop %v796
    %v798 = vmul.f32 1.0, %v797
    %v799 = vtanh.pop %v792
    %v800 = vxor.u32 %v792, 2147483648
    %v801 = vmul.f32 %v800, 1.442695
    %v802 = vpow.pop %v801
    %v803 = vadd.f32 %v802, 1.0
    %v804 = vrcp.pop %v803
    %v805 = vmul.f32 1.0, %v804
    %v807 = vrot.slane %v798, 5
    %809 = vrot.lane.b32.xlu0 %v807, 64
    %v810 = vpop.permute.xlu0 %809
    %v812 = vrot.slane %v805, 5
    %814 = vrot.lane.b32.xlu0 %v812, 64
    %v815 = vpop.permute.xlu0 %814
    %v816 = vmul.f32 %v810, %v739
    %v817 = vmul.f32 %v798, %v799
    %v819 = vrot.slane %v817, 5
    %v821 = vadd.f32 %v816, %v819
    %v822 = vtanh.pop %v821
    %v823 = vmul.f32 %v815, %v822
    %v824 = vmax.f32 %v823, 0.0
    %v825 = vpack.c.bf16 %v823, %v823
    %826 = vmatprep.subr.bf16.mxu0 %v332
    %827 = vmatpush1.bf16.msra.mxu0 %v331
    %828 = vmatprep.subr.bf16.mxu0 %v330
    %829 = vmatpush1.bf16.msra.mxu0 %v329
    %830 = vmatprep.subr.bf16.mxu0 %v328
    %831 = vmatpush1.bf16.msra.mxu0 %v327
    %832 = vmatprep.subr.bf16.mxu0 %v326
    %833 = vmatpush1.bf16.msra.mxu0 %v325
    %834 = vmatprep.subr.bf16.mxu0 %v324
    %835 = vmatpush1.bf16.msra.mxu0 %v323
    %836 = vmatprep.subr.bf16.mxu0 %v322
    %837 = vmatpush1.bf16.msra.mxu0 %v321
    %838 = vmatprep.subr.bf16.mxu0 %v320
    %839 = vmatpush1.bf16.msra.mxu0 %v319
    %840 = vmatprep.subr.bf16.mxu0 %v318
    %841 = vmatpush1.bf16.msra.mxu0 %v317
    %842 = vmatprep.subr.bf16.mxu0 0
    %843 = vmatpush2.bf16.msra.mxu0 0
    %844 = vmatprep.subr.bf16.mxu0 0
    %845 = vmatpush2.bf16.msra.mxu0 0
    %846 = vmatprep.subr.bf16.mxu0 0
    %847 = vmatpush2.bf16.msra.mxu0 0
    %848 = vmatprep.subr.bf16.mxu0 0
    %849 = vmatpush2.bf16.msra.mxu0 0
    %850 = vmatprep.subr.bf16.mxu0 0
    %851 = vmatpush2.bf16.msra.mxu0 0
    %852 = vmatprep.subr.bf16.mxu0 0
    %853 = vmatpush2.bf16.msra.mxu0 0
    %854 = vmatprep.subr.bf16.mxu0 0
    %855 = vmatpush2.bf16.msra.mxu0 0
    %856 = vmatprep.subr.bf16.mxu0 0
    %857 = vmatpush2.bf16.msra.mxu0 0
    %858 = vmatprep.mubr.bf16.mxu0 0
    %859 = vmatmul.mubr.bf16.gmra.mxu0 %v825
    %v860 = vpop.f32.mrf.mxu0
    %v861 = vadd.f32 0.0, %v860
    %v862 = vpop.f32.mrf.mxu0
    %v863 = vadd.f32 0.0, %v862
    %v864 = vpop.f32.mrf.mxu0
    %v865 = vpop.f32.mrf.mxu0
    %866 = vdwg.mxu0
    %v869 = vrot.slane %v861, 2
    %v870 = vrot.slane %v863, 2
    %v873 = vadd.f32 %v247, %v869
    %v874 = vadd.f32 %v249, %v870
    %v875 = vxor.u32 %v873, 2147483648
    %v876 = vmul.f32 %v875, 1.442695
    %v877 = vpow.pop %v876
    %v878 = vadd.f32 %v877, 1.0
    %v879 = vrcp.pop %v878
    %v880 = vmul.f32 1.0, %v879
    %v881 = vtanh.pop %v874
    %v882 = vxor.u32 %v874, 2147483648
    %v883 = vmul.f32 %v882, 1.442695
    %v884 = vpow.pop %v883
    %v885 = vadd.f32 %v884, 1.0
    %v886 = vrcp.pop %v885
    %v887 = vmul.f32 1.0, %v886
    %v889 = vrot.slane %v880, 6
    %891 = vrot.lane.b32.xlu0 %v889, 64
    %v892 = vpop.permute.xlu0 %891
    %v894 = vrot.slane %v887, 6
    %896 = vrot.lane.b32.xlu0 %v894, 64
    %v897 = vpop.permute.xlu0 %896
    %v898 = vmul.f32 %v892, %v821
    %v899 = vmul.f32 %v880, %v881
    %v901 = vrot.slane %v899, 6
    %v903 = vadd.f32 %v898, %v901
    %v904 = vtanh.pop %v903
    %v905 = vmul.f32 %v897, %v904
    %v906 = vmax.f32 %v905, 0.0
    %v907 = vpack.c.bf16 %v905, %v905
    %908 = vmatprep.subr.bf16.mxu0 %v332
    %909 = vmatpush1.bf16.msra.mxu0 %v331
    %910 = vmatprep.subr.bf16.mxu0 %v330
    %911 = vmatpush1.bf16.msra.mxu0 %v329
    %912 = vmatprep.subr.bf16.mxu0 %v328
    %913 = vmatpush1.bf16.msra.mxu0 %v327
    %914 = vmatprep.subr.bf16.mxu0 %v326
    %915 = vmatpush1.bf16.msra.mxu0 %v325
    %916 = vmatprep.subr.bf16.mxu0 %v324
    %917 = vmatpush1.bf16.msra.mxu0 %v323
    %918 = vmatprep.subr.bf16.mxu0 %v322
    %919 = vmatpush1.bf16.msra.mxu0 %v321
    %920 = vmatprep.subr.bf16.mxu0 %v320
    %921 = vmatpush1.bf16.msra.mxu0 %v319
    %922 = vmatprep.subr.bf16.mxu0 %v318
    %923 = vmatpush1.bf16.msra.mxu0 %v317
    %924 = vmatprep.subr.bf16.mxu0 0
    %925 = vmatpush2.bf16.msra.mxu0 0
    %926 = vmatprep.subr.bf16.mxu0 0
    %927 = vmatpush2.bf16.msra.mxu0 0
    %928 = vmatprep.subr.bf16.mxu0 0
    %929 = vmatpush2.bf16.msra.mxu0 0
    %930 = vmatprep.subr.bf16.mxu0 0
    %931 = vmatpush2.bf16.msra.mxu0 0
    %932 = vmatprep.subr.bf16.mxu0 0
    %933 = vmatpush2.bf16.msra.mxu0 0
    %934 = vmatprep.subr.bf16.mxu0 0
    %935 = vmatpush2.bf16.msra.mxu0 0
    %936 = vmatprep.subr.bf16.mxu0 0
    %937 = vmatpush2.bf16.msra.mxu0 0
    %938 = vmatprep.subr.bf16.mxu0 0
    %939 = vmatpush2.bf16.msra.mxu0 0
    %940 = vmatprep.mubr.bf16.mxu0 0
    %941 = vmatmul.mubr.bf16.gmra.mxu0 %v907
    %v942 = vpop.f32.mrf.mxu0
    %v943 = vadd.f32 0.0, %v942
    %v944 = vpop.f32.mrf.mxu0
    %v945 = vadd.f32 0.0, %v944
    %v946 = vpop.f32.mrf.mxu0
    %v947 = vpop.f32.mrf.mxu0
    %948 = vdwg.mxu0
    %v951 = vrot.slane %v943, 1
    %v952 = vrot.slane %v945, 1
    %v955 = vadd.f32 %v247, %v951
    %v956 = vadd.f32 %v249, %v952
    %v957 = vxor.u32 %v955, 2147483648
    %v958 = vmul.f32 %v957, 1.442695
    %v959 = vpow.pop %v958
    %v960 = vadd.f32 %v959, 1.0
    %v961 = vrcp.pop %v960
    %v962 = vmul.f32 1.0, %v961
    %v963 = vtanh.pop %v956
    %v964 = vxor.u32 %v956, 2147483648
    %v965 = vmul.f32 %v964, 1.442695
    %v966 = vpow.pop %v965
    %v967 = vadd.f32 %v966, 1.0
    %v968 = vrcp.pop %v967
    %v969 = vmul.f32 1.0, %v968
    %v971 = vrot.slane %v962, 7
    %973 = vrot.lane.b32.xlu0 %v971, 64
    %v974 = vpop.permute.xlu0 %973
    %v976 = vrot.slane %v969, 7
    %978 = vrot.lane.b32.xlu0 %v976, 64
    %v979 = vpop.permute.xlu0 %978
    %v980 = vmul.f32 %v974, %v903
    %v981 = vmul.f32 %v962, %v963
    %v983 = vrot.slane %v981, 7
    %v985 = vadd.f32 %v980, %v983
    %v986 = vtanh.pop %v985
    %v987 = vmul.f32 %v979, %v986
    %v988 = vmax.f32 %v987, 0.0
    %v990 = vrot.slane %v496, 7
    %v993 = vrot.slane %v578, 6
    %v996 = vrot.slane %v660, 5
    %v999 = vrot.slane %v742, 4
    %v1002 = vrot.slane %v824, 3
    %v1005 = vrot.slane %v906, 2
    %v1008 = vrot.slane %v988, 1
    %vm1010 = vcmask 1040384
    %v1011 = vsel %vm1010, %v414, %v990
    %vm1012 = vcmask 1041408
    %v1013 = vsel %vm1012, %v1011, %v993
    %vm1014 = vcmask 1042432
    %v1015 = vsel %vm1014, %v1013, %v996
    %vm1016 = vcmask 1043456
    %v1017 = vsel %vm1016, %v1015, %v999
    %vm1018 = vcmask 1044480
    %v1019 = vsel %vm1018, %v1017, %v1002
    %vm1020 = vcmask 1045504
    %v1021 = vsel %vm1020, %v1019, %v1005
    %vm1022 = vcmask 1046528
    %v1023 = vsel %vm1022, %v1021, %v1008
    %v1024 = vpack.c.bf16 %v1023, %v1023
    %vm1025 = vcmp.lt.s32.totalorder %v102, 32
    %v1026 = vsel %vm1025, %v987, 0.0
    %v1027 = vld [vmem:[#allocation6] sm:$0xff]
    %v1028 = vld [vmem:[#allocation6 + $0x8] sm:$0xff]
    %v1029 = vld [vmem:[#allocation6 + $0x10] sm:$0xff]
    %v1030 = vld [vmem:[#allocation6 + $0x18] sm:$0xff]
    %v1031 = vld [vmem:[#allocation6 + $0x20] sm:$0xff]
    %v1032 = vld [vmem:[#allocation6 + $0x28] sm:$0xff]
    %v1033 = vld [vmem:[#allocation6 + $0x30] sm:$0xff]
    %v1034 = vld [vmem:[#allocation6 + $0x38] sm:$0xff]
    %v1035 = vld [vmem:[#allocation6 + $0x40] sm:$0xff]
    %v1036 = vld [vmem:[#allocation6 + $0x48] sm:$0xff]
    %v1037 = vld [vmem:[#allocation6 + $0x50] sm:$0xff]
    %v1038 = vld [vmem:[#allocation6 + $0x58] sm:$0xff]
    %v1039 = vld [vmem:[#allocation6 + $0x60] sm:$0xff]
    %v1040 = vld [vmem:[#allocation6 + $0x68] sm:$0xff]
    %v1041 = vld [vmem:[#allocation6 + $0x70] sm:$0xff]
    %v1042 = vld [vmem:[#allocation6 + $0x78] sm:$0xff]
    %v1043 = vld [vmem:[%s6] sm:$0x3]
    %v1045 = vlaneseq
    %v1046 = vshrl.u32 %v1045, 7
    %v1047 = vsub.s32 0, %v1046
    %v1048 = vrot.slane %v1043, %v1047
    %v1049 = vlaneseq
    %v1050 = vshrl.u32 %v1049, 7
    %v1051 = vsub.s32 1, %v1050
    %v1052 = vrot.slane %v1043, %v1051
    %v1071 = vunpack.c.l.b16 %v1027
    %v1072 = vunpack.c.h.b16 %v1027
    %v1073 = vunpack.c.l.b16 %v1028
    %v1074 = vunpack.c.h.b16 %v1028
    %v1075 = vunpack.c.l.b16 %v1029
    %v1076 = vunpack.c.h.b16 %v1029
    %v1077 = vunpack.c.l.b16 %v1030
    %v1078 = vunpack.c.h.b16 %v1030
    %v1079 = vunpack.c.l.b16 %v1031
    %v1080 = vunpack.c.h.b16 %v1031
    %v1081 = vunpack.c.l.b16 %v1032
    %v1082 = vunpack.c.h.b16 %v1032
    %v1083 = vunpack.c.l.b16 %v1033
    %v1084 = vunpack.c.h.b16 %v1033
    %v1085 = vunpack.c.l.b16 %v1034
    %v1086 = vunpack.c.h.b16 %v1034
    %v1087 = vunpack.c.l.b16 %v1035
    %v1088 = vunpack.c.h.b16 %v1035
    %v1089 = vunpack.c.l.b16 %v1036
    %v1090 = vunpack.c.h.b16 %v1036
    %v1091 = vunpack.c.l.b16 %v1037
    %v1092 = vunpack.c.h.b16 %v1037
    %v1093 = vunpack.c.l.b16 %v1038
    %v1094 = vunpack.c.h.b16 %v1038
    %v1095 = vunpack.c.l.b16 %v1039
    %v1096 = vunpack.c.h.b16 %v1039
    %v1097 = vunpack.c.l.b16 %v1040
    %v1098 = vunpack.c.h.b16 %v1040
    %v1099 = vunpack.c.l.b16 %v1041
    %v1100 = vunpack.c.h.b16 %v1041
    %v1101 = vunpack.c.l.b16 %v1042
    %v1102 = vunpack.c.h.b16 %v1042
    %v1103 = vpack.c.b16 %v1073, %v1071
    %v1104 = vpack.c.b16 %v1074, %v1072
    %v1105 = vpack.c.b16 %v1077, %v1075
    %v1106 = vpack.c.b16 %v1078, %v1076
    %v1107 = vpack.c.b16 %v1081, %v1079
    %v1108 = vpack.c.b16 %v1082, %v1080
    %v1109 = vpack.c.b16 %v1085, %v1083
    %v1110 = vpack.c.b16 %v1086, %v1084
    %v1111 = vpack.c.b16 %v1089, %v1087
    %v1112 = vpack.c.b16 %v1090, %v1088
    %v1113 = vpack.c.b16 %v1093, %v1091
    %v1114 = vpack.c.b16 %v1094, %v1092
    %v1115 = vpack.c.b16 %v1097, %v1095
    %v1116 = vpack.c.b16 %v1098, %v1096
    %v1117 = vpack.c.b16 %v1101, %v1099
    %v1118 = vpack.c.b16 %v1102, %v1100
    %1135 = vmatprep.subr.bf16.mxu0 %v1118
    %1136 = vmatpush1.bf16.msra.mxu0 %v1117
    %1137 = vmatprep.subr.bf16.mxu0 %v1116
    %1138 = vmatpush1.bf16.msra.mxu0 %v1115
    %1139 = vmatprep.subr.bf16.mxu0 %v1114
    %1140 = vmatpush1.bf16.msra.mxu0 %v1113
    %1141 = vmatprep.subr.bf16.mxu0 %v1112
    %1142 = vmatpush1.bf16.msra.mxu0 %v1111
    %1143 = vmatprep.subr.bf16.mxu0 %v1110
    %1144 = vmatpush1.bf16.msra.mxu0 %v1109
    %1145 = vmatprep.subr.bf16.mxu0 %v1108
    %1146 = vmatpush1.bf16.msra.mxu0 %v1107
    %1147 = vmatprep.subr.bf16.mxu0 %v1106
    %1148 = vmatpush1.bf16.msra.mxu0 %v1105
    %1149 = vmatprep.subr.bf16.mxu0 %v1104
    %1150 = vmatpush1.bf16.msra.mxu0 %v1103
    %1151 = vmatprep.subr.bf16.mxu0 0
    %1152 = vmatpush2.bf16.msra.mxu0 0
    %1153 = vmatprep.subr.bf16.mxu0 0
    %1154 = vmatpush2.bf16.msra.mxu0 0
    %1155 = vmatprep.subr.bf16.mxu0 0
    %1156 = vmatpush2.bf16.msra.mxu0 0
    %1157 = vmatprep.subr.bf16.mxu0 0
    %1158 = vmatpush2.bf16.msra.mxu0 0
    %1159 = vmatprep.subr.bf16.mxu0 0
    %1160 = vmatpush2.bf16.msra.mxu0 0
    %1161 = vmatprep.subr.bf16.mxu0 0
    %1162 = vmatpush2.bf16.msra.mxu0 0
    %1163 = vmatprep.subr.bf16.mxu0 0
    %1164 = vmatpush2.bf16.msra.mxu0 0
    %1165 = vmatprep.subr.bf16.mxu0 0
    %1166 = vmatpush2.bf16.msra.mxu0 0
    %1167 = vmatprep.mubr.bf16.mxu0 0
    %1168 = vmatmul.mubr.bf16.gmra.mxu0 %v1024
    %v1169 = vpop.f32.mrf.mxu0
    %v1170 = vadd.f32 %v1048, %v1169
    %v1171 = vpop.f32.mrf.mxu0
    %v1172 = vadd.f32 %v1052, %v1171
    %v1173 = vpop.f32.mrf.mxu0
    %v1174 = vpop.f32.mrf.mxu0
    %1175 = vdwg.mxu0
    %v1176 = vpack.c.bf16 %v1026, %v1026
    %v1177 = vld [vmem:[#allocation7] sm:$0xff]
    %v1178 = vld [vmem:[#allocation7 + $0x8] sm:$0xff]
    %v1179 = vld [vmem:[#allocation7 + $0x10] sm:$0xff]
    %v1180 = vld [vmem:[#allocation7 + $0x18] sm:$0xff]
    %v1181 = vld [vmem:[#allocation7 + $0x20] sm:$0xff]
    %v1182 = vld [vmem:[#allocation7 + $0x28] sm:$0xff]
    %v1183 = vld [vmem:[#allocation7 + $0x30] sm:$0xff]
    %v1184 = vld [vmem:[#allocation7 + $0x38] sm:$0xff]
    %v1185 = vld [vmem:[#allocation7 + $0x40] sm:$0xff]
    %v1186 = vld [vmem:[#allocation7 + $0x48] sm:$0xff]
    %v1187 = vld [vmem:[#allocation7 + $0x50] sm:$0xff]
    %v1188 = vld [vmem:[#allocation7 + $0x58] sm:$0xff]
    %v1189 = vld [vmem:[#allocation7 + $0x60] sm:$0xff]
    %v1190 = vld [vmem:[#allocation7 + $0x68] sm:$0xff]
    %v1191 = vld [vmem:[#allocation7 + $0x70] sm:$0xff]
    %v1192 = vld [vmem:[#allocation7 + $0x78] sm:$0xff]
    %v1209 = vunpack.c.l.b16 %v1177
    %v1210 = vunpack.c.h.b16 %v1177
    %v1211 = vunpack.c.l.b16 %v1178
    %v1212 = vunpack.c.h.b16 %v1178
    %v1213 = vunpack.c.l.b16 %v1179
    %v1214 = vunpack.c.h.b16 %v1179
    %v1215 = vunpack.c.l.b16 %v1180
    %v1216 = vunpack.c.h.b16 %v1180
    %v1217 = vunpack.c.l.b16 %v1181
    %v1218 = vunpack.c.h.b16 %v1181
    %v1219 = vunpack.c.l.b16 %v1182
    %v1220 = vunpack.c.h.b16 %v1182
    %v1221 = vunpack.c.l.b16 %v1183
    %v1222 = vunpack.c.h.b16 %v1183
    %v1223 = vunpack.c.l.b16 %v1184
    %v1224 = vunpack.c.h.b16 %v1184
    %v1225 = vunpack.c.l.b16 %v1185
    %v1226 = vunpack.c.h.b16 %v1185
    %v1227 = vunpack.c.l.b16 %v1186
    %v1228 = vunpack.c.h.b16 %v1186
    %v1229 = vunpack.c.l.b16 %v1187
    %v1230 = vunpack.c.h.b16 %v1187
    %v1231 = vunpack.c.l.b16 %v1188
    %v1232 = vunpack.c.h.b16 %v1188
    %v1233 = vunpack.c.l.b16 %v1189
    %v1234 = vunpack.c.h.b16 %v1189
    %v1235 = vunpack.c.l.b16 %v1190
    %v1236 = vunpack.c.h.b16 %v1190
    %v1237 = vunpack.c.l.b16 %v1191
    %v1238 = vunpack.c.h.b16 %v1191
    %v1239 = vunpack.c.l.b16 %v1192
    %v1240 = vunpack.c.h.b16 %v1192
    %v1241 = vpack.c.b16 %v1211, %v1209
    %v1242 = vpack.c.b16 %v1212, %v1210
    %v1243 = vpack.c.b16 %v1215, %v1213
    %v1244 = vpack.c.b16 %v1216, %v1214
    %v1245 = vpack.c.b16 %v1219, %v1217
    %v1246 = vpack.c.b16 %v1220, %v1218
    %v1247 = vpack.c.b16 %v1223, %v1221
    %v1248 = vpack.c.b16 %v1224, %v1222
    %v1249 = vpack.c.b16 %v1227, %v1225
    %v1250 = vpack.c.b16 %v1228, %v1226
    %v1251 = vpack.c.b16 %v1231, %v1229
    %v1252 = vpack.c.b16 %v1232, %v1230
    %v1253 = vpack.c.b16 %v1235, %v1233
    %v1254 = vpack.c.b16 %v1236, %v1234
    %v1255 = vpack.c.b16 %v1239, %v1237
    %v1256 = vpack.c.b16 %v1240, %v1238
    %1273 = vmatprep.subr.bf16.mxu0 %v1256
    %1274 = vmatpush1.bf16.msra.mxu0 %v1255
    %1275 = vmatprep.subr.bf16.mxu0 %v1254
    %1276 = vmatpush1.bf16.msra.mxu0 %v1253
    %1277 = vmatprep.subr.bf16.mxu0 %v1252
    %1278 = vmatpush1.bf16.msra.mxu0 %v1251
    %1279 = vmatprep.subr.bf16.mxu0 %v1250
    %1280 = vmatpush1.bf16.msra.mxu0 %v1249
    %1281 = vmatprep.subr.bf16.mxu0 %v1248
    %1282 = vmatpush1.bf16.msra.mxu0 %v1247
    %1283 = vmatprep.subr.bf16.mxu0 %v1246
    %1284 = vmatpush1.bf16.msra.mxu0 %v1245
    %1285 = vmatprep.subr.bf16.mxu0 %v1244
    %1286 = vmatpush1.bf16.msra.mxu0 %v1243
    %1287 = vmatprep.subr.bf16.mxu0 %v1242
    %1288 = vmatpush1.bf16.msra.mxu0 %v1241
    %1289 = vmatprep.subr.bf16.mxu0 0
    %1290 = vmatpush2.bf16.msra.mxu0 0
    %1291 = vmatprep.subr.bf16.mxu0 0
    %1292 = vmatpush2.bf16.msra.mxu0 0
    %1293 = vmatprep.subr.bf16.mxu0 0
    %1294 = vmatpush2.bf16.msra.mxu0 0
    %1295 = vmatprep.subr.bf16.mxu0 0
    %1296 = vmatpush2.bf16.msra.mxu0 0
    %1297 = vmatprep.subr.bf16.mxu0 0
    %1298 = vmatpush2.bf16.msra.mxu0 0
    %1299 = vmatprep.subr.bf16.mxu0 0
    %1300 = vmatpush2.bf16.msra.mxu0 0
    %1301 = vmatprep.subr.bf16.mxu0 0
    %1302 = vmatpush2.bf16.msra.mxu0 0
    %1303 = vmatprep.subr.bf16.mxu0 0
    %1304 = vmatpush2.bf16.msra.mxu0 0
    %1305 = vmatprep.mubr.bf16.mxu0 0
    %1306 = vmatmul.mubr.bf16.gmra.mxu0 %v1176
    %v1307 = vpop.f32.mrf.mxu0
    %v1308 = vadd.f32 0.0, %v1307
    %v1309 = vpop.f32.mrf.mxu0
    %v1310 = vadd.f32 0.0, %v1309
    %v1311 = vpop.f32.mrf.mxu0
    %v1312 = vpop.f32.mrf.mxu0
    %1313 = vdwg.mxu0
    %v1314 = vadd.f32 %v1170, %v1308
    %v1315 = vadd.f32 %v1172, %v1310
    %v1316 = vxor.u32 %v1314, 2147483648
    %v1317 = vmul.f32 %v1316, 1.442695
    %v1318 = vpow.pop %v1317
    %v1319 = vadd.f32 %v1318, 1.0
    %v1320 = vrcp.pop %v1319
    %v1321 = vmul.f32 1.0, %v1320
    %v1322 = vtanh.pop %v1315
    %v1323 = vxor.u32 %v1315, 2147483648
    %v1324 = vmul.f32 %v1323, 1.442695
    %v1325 = vpow.pop %v1324
    %v1326 = vadd.f32 %v1325, 1.0
    %v1327 = vrcp.pop %v1326
    %v1328 = vmul.f32 1.0, %v1327
    %1329 = vrot.lane.b32.xlu0 %v1321, 64
    %v1330 = vpop.permute.xlu0 %1329
    %1331 = vrot.lane.b32.xlu0 %v1328, 64
    %v1332 = vpop.permute.xlu0 %1331
    %v1333 = vmul.f32 %v1330, 0.0
    %v1334 = vmul.f32 %v1321, %v1322
    %v1335 = vadd.f32 %v1333, %v1334
    %v1336 = vtanh.pop %v1335
    %v1337 = vmul.f32 %v1332, %v1336
    %v1338 = vmax.f32 %v1337, 0.0
    %v1339 = vpack.c.bf16 %v1337, %v1337
    %1340 = vmatprep.subr.bf16.mxu0 %v1256
    %1341 = vmatpush1.bf16.msra.mxu0 %v1255
    %1342 = vmatprep.subr.bf16.mxu0 %v1254
    %1343 = vmatpush1.bf16.msra.mxu0 %v1253
    %1344 = vmatprep.subr.bf16.mxu0 %v1252
    %1345 = vmatpush1.bf16.msra.mxu0 %v1251
    %1346 = vmatprep.subr.bf16.mxu0 %v1250
    %1347 = vmatpush1.bf16.msra.mxu0 %v1249
    %1348 = vmatprep.subr.bf16.mxu0 %v1248
    %1349 = vmatpush1.bf16.msra.mxu0 %v1247
    %1350 = vmatprep.subr.bf16.mxu0 %v1246
    %1351 = vmatpush1.bf16.msra.mxu0 %v1245
    %1352 = vmatprep.subr.bf16.mxu0 %v1244
    %1353 = vmatpush1.bf16.msra.mxu0 %v1243
    %1354 = vmatprep.subr.bf16.mxu0 %v1242
    %1355 = vmatpush1.bf16.msra.mxu0 %v1241
    %1356 = vmatprep.subr.bf16.mxu0 0
    %1357 = vmatpush2.bf16.msra.mxu0 0
    %1358 = vmatprep.subr.bf16.mxu0 0
    %1359 = vmatpush2.bf16.msra.mxu0 0
    %1360 = vmatprep.subr.bf16.mxu0 0
    %1361 = vmatpush2.bf16.msra.mxu0 0
    %1362 = vmatprep.subr.bf16.mxu0 0
    %1363 = vmatpush2.bf16.msra.mxu0 0
    %1364 = vmatprep.subr.bf16.mxu0 0
    %1365 = vmatpush2.bf16.msra.mxu0 0
    %1366 = vmatprep.subr.bf16.mxu0 0
    %1367 = vmatpush2.bf16.msra.mxu0 0
    %1368 = vmatprep.subr.bf16.mxu0 0
    %1369 = vmatpush2.bf16.msra.mxu0 0
    %1370 = vmatprep.subr.bf16.mxu0 0
    %1371 = vmatpush2.bf16.msra.mxu0 0
    %1372 = vmatprep.mubr.bf16.mxu0 0
    %1373 = vmatmul.mubr.bf16.gmra.mxu0 %v1339
    %v1374 = vpop.f32.mrf.mxu0
    %v1375 = vadd.f32 0.0, %v1374
    %v1376 = vpop.f32.mrf.mxu0
    %v1377 = vadd.f32 0.0, %v1376
    %v1378 = vpop.f32.mrf.mxu0
    %v1379 = vpop.f32.mrf.mxu0
    %1380 = vdwg.mxu0
    %v1383 = vrot.slane %v1375, 7
    %v1384 = vrot.slane %v1377, 7
    %v1387 = vadd.f32 %v1170, %v1383
    %v1388 = vadd.f32 %v1172, %v1384
    %v1389 = vxor.u32 %v1387, 2147483648
    %v1390 = vmul.f32 %v1389, 1.442695
    %v1391 = vpow.pop %v1390
    %v1392 = vadd.f32 %v1391, 1.0
    %v1393 = vrcp.pop %v1392
    %v1394 = vmul.f32 1.0, %v1393
    %v1395 = vtanh.pop %v1388
    %v1396 = vxor.u32 %v1388, 2147483648
    %v1397 = vmul.f32 %v1396, 1.442695
    %v1398 = vpow.pop %v1397
    %v1399 = vadd.f32 %v1398, 1.0
    %v1400 = vrcp.pop %v1399
    %v1401 = vmul.f32 1.0, %v1400
    %v1403 = vrot.slane %v1394, 1
    %1405 = vrot.lane.b32.xlu0 %v1403, 64
    %v1406 = vpop.permute.xlu0 %1405
    %v1408 = vrot.slane %v1401, 1
    %1410 = vrot.lane.b32.xlu0 %v1408, 64
    %v1411 = vpop.permute.xlu0 %1410
    %v1412 = vmul.f32 %v1406, %v1335
    %v1413 = vmul.f32 %v1394, %v1395
    %v1415 = vrot.slane %v1413, 1
    %v1417 = vadd.f32 %v1412, %v1415
    %v1418 = vtanh.pop %v1417
    %v1419 = vmul.f32 %v1411, %v1418
    %v1420 = vmax.f32 %v1419, 0.0
    %v1421 = vpack.c.bf16 %v1419, %v1419
    %1422 = vmatprep.subr.bf16.mxu0 %v1256
    %1423 = vmatpush1.bf16.msra.mxu0 %v1255
    %1424 = vmatprep.subr.bf16.mxu0 %v1254
    %1425 = vmatpush1.bf16.msra.mxu0 %v1253
    %1426 = vmatprep.subr.bf16.mxu0 %v1252
    %1427 = vmatpush1.bf16.msra.mxu0 %v1251
    %1428 = vmatprep.subr.bf16.mxu0 %v1250
    %1429 = vmatpush1.bf16.msra.mxu0 %v1249
    %1430 = vmatprep.subr.bf16.mxu0 %v1248
    %1431 = vmatpush1.bf16.msra.mxu0 %v1247
    %1432 = vmatprep.subr.bf16.mxu0 %v1246
    %1433 = vmatpush1.bf16.msra.mxu0 %v1245
    %1434 = vmatprep.subr.bf16.mxu0 %v1244
    %1435 = vmatpush1.bf16.msra.mxu0 %v1243
    %1436 = vmatprep.subr.bf16.mxu0 %v1242
    %1437 = vmatpush1.bf16.msra.mxu0 %v1241
    %1438 = vmatprep.subr.bf16.mxu0 0
    %1439 = vmatpush2.bf16.msra.mxu0 0
    %1440 = vmatprep.subr.bf16.mxu0 0
    %1441 = vmatpush2.bf16.msra.mxu0 0
    %1442 = vmatprep.subr.bf16.mxu0 0
    %1443 = vmatpush2.bf16.msra.mxu0 0
    %1444 = vmatprep.subr.bf16.mxu0 0
    %1445 = vmatpush2.bf16.msra.mxu0 0
    %1446 = vmatprep.subr.bf16.mxu0 0
    %1447 = vmatpush2.bf16.msra.mxu0 0
    %1448 = vmatprep.subr.bf16.mxu0 0
    %1449 = vmatpush2.bf16.msra.mxu0 0
    %1450 = vmatprep.subr.bf16.mxu0 0
    %1451 = vmatpush2.bf16.msra.mxu0 0
    %1452 = vmatprep.subr.bf16.mxu0 0
    %1453 = vmatpush2.bf16.msra.mxu0 0
    %1454 = vmatprep.mubr.bf16.mxu0 0
    %1455 = vmatmul.mubr.bf16.gmra.mxu0 %v1421
    %v1456 = vpop.f32.mrf.mxu0
    %v1457 = vadd.f32 0.0, %v1456
    %v1458 = vpop.f32.mrf.mxu0
    %v1459 = vadd.f32 0.0, %v1458
    %v1460 = vpop.f32.mrf.mxu0
    %v1461 = vpop.f32.mrf.mxu0
    %1462 = vdwg.mxu0
    %v1465 = vrot.slane %v1457, 6
    %v1466 = vrot.slane %v1459, 6
    %v1469 = vadd.f32 %v1170, %v1465
    %v1470 = vadd.f32 %v1172, %v1466
    %v1471 = vxor.u32 %v1469, 2147483648
    %v1472 = vmul.f32 %v1471, 1.442695
    %v1473 = vpow.pop %v1472
    %v1474 = vadd.f32 %v1473, 1.0
    %v1475 = vrcp.pop %v1474
    %v1476 = vmul.f32 1.0, %v1475
    %v1477 = vtanh.pop %v1470
    %v1478 = vxor.u32 %v1470, 2147483648
    %v1479 = vmul.f32 %v1478, 1.442695
    %v1480 = vpow.pop %v1479
    %v1481 = vadd.f32 %v1480, 1.0
    %v1482 = vrcp.pop %v1481
    %v1483 = vmul.f32 1.0, %v1482
    %v1485 = vrot.slane %v1476, 2
    %1487 = vrot.lane.b32.xlu0 %v1485, 64
    %v1488 = vpop.permute.xlu0 %1487
    %v1490 = vrot.slane %v1483, 2
    %1492 = vrot.lane.b32.xlu0 %v1490, 64
    %v1493 = vpop.permute.xlu0 %1492
    %v1494 = vmul.f32 %v1488, %v1417
    %v1495 = vmul.f32 %v1476, %v1477
    %v1497 = vrot.slane %v1495, 2
    %v1499 = vadd.f32 %v1494, %v1497
    %v1500 = vtanh.pop %v1499
    %v1501 = vmul.f32 %v1493, %v1500
    %v1502 = vmax.f32 %v1501, 0.0
    %v1503 = vpack.c.bf16 %v1501, %v1501
    %1504 = vmatprep.subr.bf16.mxu0 %v1256
    %1505 = vmatpush1.bf16.msra.mxu0 %v1255
    %1506 = vmatprep.subr.bf16.mxu0 %v1254
    %1507 = vmatpush1.bf16.msra.mxu0 %v1253
    %1508 = vmatprep.subr.bf16.mxu0 %v1252
    %1509 = vmatpush1.bf16.msra.mxu0 %v1251
    %1510 = vmatprep.subr.bf16.mxu0 %v1250
    %1511 = vmatpush1.bf16.msra.mxu0 %v1249
    %1512 = vmatprep.subr.bf16.mxu0 %v1248
    %1513 = vmatpush1.bf16.msra.mxu0 %v1247
    %1514 = vmatprep.subr.bf16.mxu0 %v1246
    %1515 = vmatpush1.bf16.msra.mxu0 %v1245
    %1516 = vmatprep.subr.bf16.mxu0 %v1244
    %1517 = vmatpush1.bf16.msra.mxu0 %v1243
    %1518 = vmatprep.subr.bf16.mxu0 %v1242
    %1519 = vmatpush1.bf16.msra.mxu0 %v1241
    %1520 = vmatprep.subr.bf16.mxu0 0
    %1521 = vmatpush2.bf16.msra.mxu0 0
    %1522 = vmatprep.subr.bf16.mxu0 0
    %1523 = vmatpush2.bf16.msra.mxu0 0
    %1524 = vmatprep.subr.bf16.mxu0 0
    %1525 = vmatpush2.bf16.msra.mxu0 0
    %1526 = vmatprep.subr.bf16.mxu0 0
    %1527 = vmatpush2.bf16.msra.mxu0 0
    %1528 = vmatprep.subr.bf16.mxu0 0
    %1529 = vmatpush2.bf16.msra.mxu0 0
    %1530 = vmatprep.subr.bf16.mxu0 0
    %1531 = vmatpush2.bf16.msra.mxu0 0
    %1532 = vmatprep.subr.bf16.mxu0 0
    %1533 = vmatpush2.bf16.msra.mxu0 0
    %1534 = vmatprep.subr.bf16.mxu0 0
    %1535 = vmatpush2.bf16.msra.mxu0 0
    %1536 = vmatprep.mubr.bf16.mxu0 0
    %1537 = vmatmul.mubr.bf16.gmra.mxu0 %v1503
    %v1538 = vpop.f32.mrf.mxu0
    %v1539 = vadd.f32 0.0, %v1538
    %v1540 = vpop.f32.mrf.mxu0
    %v1541 = vadd.f32 0.0, %v1540
    %v1542 = vpop.f32.mrf.mxu0
    %v1543 = vpop.f32.mrf.mxu0
    %1544 = vdwg.mxu0
    %v1547 = vrot.slane %v1539, 5
    %v1548 = vrot.slane %v1541, 5
    %v1551 = vadd.f32 %v1170, %v1547
    %v1552 = vadd.f32 %v1172, %v1548
    %v1553 = vxor.u32 %v1551, 2147483648
    %v1554 = vmul.f32 %v1553, 1.442695
    %v1555 = vpow.pop %v1554
    %v1556 = vadd.f32 %v1555, 1.0
    %v1557 = vrcp.pop %v1556
    %v1558 = vmul.f32 1.0, %v1557
    %v1559 = vtanh.pop %v1552
    %v1560 = vxor.u32 %v1552, 2147483648
    %v1561 = vmul.f32 %v1560, 1.442695
    %v1562 = vpow.pop %v1561
    %v1563 = vadd.f32 %v1562, 1.0
    %v1564 = vrcp.pop %v1563
    %v1565 = vmul.f32 1.0, %v1564
    %v1567 = vrot.slane %v1558, 3
    %1569 = vrot.lane.b32.xlu0 %v1567, 64
    %v1570 = vpop.permute.xlu0 %1569
    %v1572 = vrot.slane %v1565, 3
    %1574 = vrot.lane.b32.xlu0 %v1572, 64
    %v1575 = vpop.permute.xlu0 %1574
    %v1576 = vmul.f32 %v1570, %v1499
    %v1577 = vmul.f32 %v1558, %v1559
    %v1579 = vrot.slane %v1577, 3
    %v1581 = vadd.f32 %v1576, %v1579
    %v1582 = vtanh.pop %v1581
    %v1583 = vmul.f32 %v1575, %v1582
    %v1584 = vmax.f32 %v1583, 0.0
    %v1585 = vpack.c.bf16 %v1583, %v1583
    %1586 = vmatprep.subr.bf16.mxu0 %v1256
    %1587 = vmatpush1.bf16.msra.mxu0 %v1255
    %1588 = vmatprep.subr.bf16.mxu0 %v1254
    %1589 = vmatpush1.bf16.msra.mxu0 %v1253
    %1590 = vmatprep.subr.bf16.mxu0 %v1252
    %1591 = vmatpush1.bf16.msra.mxu0 %v1251
    %1592 = vmatprep.subr.bf16.mxu0 %v1250
    %1593 = vmatpush1.bf16.msra.mxu0 %v1249
    %1594 = vmatprep.subr.bf16.mxu0 %v1248
    %1595 = vmatpush1.bf16.msra.mxu0 %v1247
    %1596 = vmatprep.subr.bf16.mxu0 %v1246
    %1597 = vmatpush1.bf16.msra.mxu0 %v1245
    %1598 = vmatprep.subr.bf16.mxu0 %v1244
    %1599 = vmatpush1.bf16.msra.mxu0 %v1243
    %1600 = vmatprep.subr.bf16.mxu0 %v1242
    %1601 = vmatpush1.bf16.msra.mxu0 %v1241
    %1602 = vmatprep.subr.bf16.mxu0 0
    %1603 = vmatpush2.bf16.msra.mxu0 0
    %1604 = vmatprep.subr.bf16.mxu0 0
    %1605 = vmatpush2.bf16.msra.mxu0 0
    %1606 = vmatprep.subr.bf16.mxu0 0
    %1607 = vmatpush2.bf16.msra.mxu0 0
    %1608 = vmatprep.subr.bf16.mxu0 0
    %1609 = vmatpush2.bf16.msra.mxu0 0
    %1610 = vmatprep.subr.bf16.mxu0 0
    %1611 = vmatpush2.bf16.msra.mxu0 0
    %1612 = vmatprep.subr.bf16.mxu0 0
    %1613 = vmatpush2.bf16.msra.mxu0 0
    %1614 = vmatprep.subr.bf16.mxu0 0
    %1615 = vmatpush2.bf16.msra.mxu0 0
    %1616 = vmatprep.subr.bf16.mxu0 0
    %1617 = vmatpush2.bf16.msra.mxu0 0
    %1618 = vmatprep.mubr.bf16.mxu0 0
    %1619 = vmatmul.mubr.bf16.gmra.mxu0 %v1585
    %v1620 = vpop.f32.mrf.mxu0
    %v1621 = vadd.f32 0.0, %v1620
    %v1622 = vpop.f32.mrf.mxu0
    %v1623 = vadd.f32 0.0, %v1622
    %v1624 = vpop.f32.mrf.mxu0
    %v1625 = vpop.f32.mrf.mxu0
    %1626 = vdwg.mxu0
    %v1629 = vrot.slane %v1621, 4
    %v1630 = vrot.slane %v1623, 4
    %v1633 = vadd.f32 %v1170, %v1629
    %v1634 = vadd.f32 %v1172, %v1630
    %v1635 = vxor.u32 %v1633, 2147483648
    %v1636 = vmul.f32 %v1635, 1.442695
    %v1637 = vpow.pop %v1636
    %v1638 = vadd.f32 %v1637, 1.0
    %v1639 = vrcp.pop %v1638
    %v1640 = vmul.f32 1.0, %v1639
    %v1641 = vtanh.pop %v1634
    %v1642 = vxor.u32 %v1634, 2147483648
    %v1643 = vmul.f32 %v1642, 1.442695
    %v1644 = vpow.pop %v1643
    %v1645 = vadd.f32 %v1644, 1.0
    %v1646 = vrcp.pop %v1645
    %v1647 = vmul.f32 1.0, %v1646
    %v1649 = vrot.slane %v1640, 4
    %1651 = vrot.lane.b32.xlu0 %v1649, 64
    %v1652 = vpop.permute.xlu0 %1651
    %v1654 = vrot.slane %v1647, 4
    %1656 = vrot.lane.b32.xlu0 %v1654, 64
    %v1657 = vpop.permute.xlu0 %1656
    %v1658 = vmul.f32 %v1652, %v1581
    %v1659 = vmul.f32 %v1640, %v1641
    %v1661 = vrot.slane %v1659, 4
    %v1663 = vadd.f32 %v1658, %v1661
    %v1664 = vtanh.pop %v1663
    %v1665 = vmul.f32 %v1657, %v1664
    %v1666 = vmax.f32 %v1665, 0.0
    %v1667 = vpack.c.bf16 %v1665, %v1665
    %1668 = vmatprep.subr.bf16.mxu0 %v1256
    %1669 = vmatpush1.bf16.msra.mxu0 %v1255
    %1670 = vmatprep.subr.bf16.mxu0 %v1254
    %1671 = vmatpush1.bf16.msra.mxu0 %v1253
    %1672 = vmatprep.subr.bf16.mxu0 %v1252
    %1673 = vmatpush1.bf16.msra.mxu0 %v1251
    %1674 = vmatprep.subr.bf16.mxu0 %v1250
    %1675 = vmatpush1.bf16.msra.mxu0 %v1249
    %1676 = vmatprep.subr.bf16.mxu0 %v1248
    %1677 = vmatpush1.bf16.msra.mxu0 %v1247
    %1678 = vmatprep.subr.bf16.mxu0 %v1246
    %1679 = vmatpush1.bf16.msra.mxu0 %v1245
    %1680 = vmatprep.subr.bf16.mxu0 %v1244
    %1681 = vmatpush1.bf16.msra.mxu0 %v1243
    %1682 = vmatprep.subr.bf16.mxu0 %v1242
    %1683 = vmatpush1.bf16.msra.mxu0 %v1241
    %1684 = vmatprep.subr.bf16.mxu0 0
    %1685 = vmatpush2.bf16.msra.mxu0 0
    %1686 = vmatprep.subr.bf16.mxu0 0
    %1687 = vmatpush2.bf16.msra.mxu0 0
    %1688 = vmatprep.subr.bf16.mxu0 0
    %1689 = vmatpush2.bf16.msra.mxu0 0
    %1690 = vmatprep.subr.bf16.mxu0 0
    %1691 = vmatpush2.bf16.msra.mxu0 0
    %1692 = vmatprep.subr.bf16.mxu0 0
    %1693 = vmatpush2.bf16.msra.mxu0 0
    %1694 = vmatprep.subr.bf16.mxu0 0
    %1695 = vmatpush2.bf16.msra.mxu0 0
    %1696 = vmatprep.subr.bf16.mxu0 0
    %1697 = vmatpush2.bf16.msra.mxu0 0
    %1698 = vmatprep.subr.bf16.mxu0 0
    %1699 = vmatpush2.bf16.msra.mxu0 0
    %1700 = vmatprep.mubr.bf16.mxu0 0
    %1701 = vmatmul.mubr.bf16.gmra.mxu0 %v1667
    %v1702 = vpop.f32.mrf.mxu0
    %v1703 = vadd.f32 0.0, %v1702
    %v1704 = vpop.f32.mrf.mxu0
    %v1705 = vadd.f32 0.0, %v1704
    %v1706 = vpop.f32.mrf.mxu0
    %v1707 = vpop.f32.mrf.mxu0
    %1708 = vdwg.mxu0
    %v1711 = vrot.slane %v1703, 3
    %v1712 = vrot.slane %v1705, 3
    %v1715 = vadd.f32 %v1170, %v1711
    %v1716 = vadd.f32 %v1172, %v1712
    %v1717 = vxor.u32 %v1715, 2147483648
    %v1718 = vmul.f32 %v1717, 1.442695
    %v1719 = vpow.pop %v1718
    %v1720 = vadd.f32 %v1719, 1.0
    %v1721 = vrcp.pop %v1720
    %v1722 = vmul.f32 1.0, %v1721
    %v1723 = vtanh.pop %v1716
    %v1724 = vxor.u32 %v1716, 2147483648
    %v1725 = vmul.f32 %v1724, 1.442695
    %v1726 = vpow.pop %v1725
    %v1727 = vadd.f32 %v1726, 1.0
    %v1728 = vrcp.pop %v1727
    %v1729 = vmul.f32 1.0, %v1728
    %v1731 = vrot.slane %v1722, 5
    %1733 = vrot.lane.b32.xlu0 %v1731, 64
    %v1734 = vpop.permute.xlu0 %1733
    %v1736 = vrot.slane %v1729, 5
    %1738 = vrot.lane.b32.xlu0 %v1736, 64
    %v1739 = vpop.permute.xlu0 %1738
    %v1740 = vmul.f32 %v1734, %v1663
    %v1741 = vmul.f32 %v1722, %v1723
    %v1743 = vrot.slane %v1741, 5
    %v1745 = vadd.f32 %v1740, %v1743
    %v1746 = vtanh.pop %v1745
    %v1747 = vmul.f32 %v1739, %v1746
    %v1748 = vmax.f32 %v1747, 0.0
    %v1749 = vpack.c.bf16 %v1747, %v1747
    %1750 = vmatprep.subr.bf16.mxu0 %v1256
    %1751 = vmatpush1.bf16.msra.mxu0 %v1255
    %1752 = vmatprep.subr.bf16.mxu0 %v1254
    %1753 = vmatpush1.bf16.msra.mxu0 %v1253
    %1754 = vmatprep.subr.bf16.mxu0 %v1252
    %1755 = vmatpush1.bf16.msra.mxu0 %v1251
    %1756 = vmatprep.subr.bf16.mxu0 %v1250
    %1757 = vmatpush1.bf16.msra.mxu0 %v1249
    %1758 = vmatprep.subr.bf16.mxu0 %v1248
    %1759 = vmatpush1.bf16.msra.mxu0 %v1247
    %1760 = vmatprep.subr.bf16.mxu0 %v1246
    %1761 = vmatpush1.bf16.msra.mxu0 %v1245
    %1762 = vmatprep.subr.bf16.mxu0 %v1244
    %1763 = vmatpush1.bf16.msra.mxu0 %v1243
    %1764 = vmatprep.subr.bf16.mxu0 %v1242
    %1765 = vmatpush1.bf16.msra.mxu0 %v1241
    %1766 = vmatprep.subr.bf16.mxu0 0
    %1767 = vmatpush2.bf16.msra.mxu0 0
    %1768 = vmatprep.subr.bf16.mxu0 0
    %1769 = vmatpush2.bf16.msra.mxu0 0
    %1770 = vmatprep.subr.bf16.mxu0 0
    %1771 = vmatpush2.bf16.msra.mxu0 0
    %1772 = vmatprep.subr.bf16.mxu0 0
    %1773 = vmatpush2.bf16.msra.mxu0 0
    %1774 = vmatprep.subr.bf16.mxu0 0
    %1775 = vmatpush2.bf16.msra.mxu0 0
    %1776 = vmatprep.subr.bf16.mxu0 0
    %1777 = vmatpush2.bf16.msra.mxu0 0
    %1778 = vmatprep.subr.bf16.mxu0 0
    %1779 = vmatpush2.bf16.msra.mxu0 0
    %1780 = vmatprep.subr.bf16.mxu0 0
    %1781 = vmatpush2.bf16.msra.mxu0 0
    %1782 = vmatprep.mubr.bf16.mxu0 0
    %1783 = vmatmul.mubr.bf16.gmra.mxu0 %v1749
    %v1784 = vpop.f32.mrf.mxu0
    %v1785 = vadd.f32 0.0, %v1784
    %v1786 = vpop.f32.mrf.mxu0
    %v1787 = vadd.f32 0.0, %v1786
    %v1788 = vpop.f32.mrf.mxu0
    %v1789 = vpop.f32.mrf.mxu0
    %1790 = vdwg.mxu0
    %v1793 = vrot.slane %v1785, 2
    %v1794 = vrot.slane %v1787, 2
    %v1797 = vadd.f32 %v1170, %v1793
    %v1798 = vadd.f32 %v1172, %v1794
    %v1799 = vxor.u32 %v1797, 2147483648
    %v1800 = vmul.f32 %v1799, 1.442695
    %v1801 = vpow.pop %v1800
    %v1802 = vadd.f32 %v1801, 1.0
    %v1803 = vrcp.pop %v1802
    %v1804 = vmul.f32 1.0, %v1803
    %v1805 = vtanh.pop %v1798
    %v1806 = vxor.u32 %v1798, 2147483648
    %v1807 = vmul.f32 %v1806, 1.442695
    %v1808 = vpow.pop %v1807
    %v1809 = vadd.f32 %v1808, 1.0
    %v1810 = vrcp.pop %v1809
    %v1811 = vmul.f32 1.0, %v1810
    %v1813 = vrot.slane %v1804, 6
    %1815 = vrot.lane.b32.xlu0 %v1813, 64
    %v1816 = vpop.permute.xlu0 %1815
    %v1818 = vrot.slane %v1811, 6
    %1820 = vrot.lane.b32.xlu0 %v1818, 64
    %v1821 = vpop.permute.xlu0 %1820
    %v1822 = vmul.f32 %v1816, %v1745
    %v1823 = vmul.f32 %v1804, %v1805
    %v1825 = vrot.slane %v1823, 6
    %v1827 = vadd.f32 %v1822, %v1825
    %v1828 = vtanh.pop %v1827
    %v1829 = vmul.f32 %v1821, %v1828
    %v1830 = vmax.f32 %v1829, 0.0
    %v1831 = vpack.c.bf16 %v1829, %v1829
    %1832 = vmatprep.subr.bf16.mxu0 %v1256
    %1833 = vmatpush1.bf16.msra.mxu0 %v1255
    %1834 = vmatprep.subr.bf16.mxu0 %v1254
    %1835 = vmatpush1.bf16.msra.mxu0 %v1253
    %1836 = vmatprep.subr.bf16.mxu0 %v1252
    %1837 = vmatpush1.bf16.msra.mxu0 %v1251
    %1838 = vmatprep.subr.bf16.mxu0 %v1250
    %1839 = vmatpush1.bf16.msra.mxu0 %v1249
    %1840 = vmatprep.subr.bf16.mxu0 %v1248
    %1841 = vmatpush1.bf16.msra.mxu0 %v1247
    %1842 = vmatprep.subr.bf16.mxu0 %v1246
    %1843 = vmatpush1.bf16.msra.mxu0 %v1245
    %1844 = vmatprep.subr.bf16.mxu0 %v1244
    %1845 = vmatpush1.bf16.msra.mxu0 %v1243
    %1846 = vmatprep.subr.bf16.mxu0 %v1242
    %1847 = vmatpush1.bf16.msra.mxu0 %v1241
    %1848 = vmatprep.subr.bf16.mxu0 0
    %1849 = vmatpush2.bf16.msra.mxu0 0
    %1850 = vmatprep.subr.bf16.mxu0 0
    %1851 = vmatpush2.bf16.msra.mxu0 0
    %1852 = vmatprep.subr.bf16.mxu0 0
    %1853 = vmatpush2.bf16.msra.mxu0 0
    %1854 = vmatprep.subr.bf16.mxu0 0
    %1855 = vmatpush2.bf16.msra.mxu0 0
    %1856 = vmatprep.subr.bf16.mxu0 0
    %1857 = vmatpush2.bf16.msra.mxu0 0
    %1858 = vmatprep.subr.bf16.mxu0 0
    %1859 = vmatpush2.bf16.msra.mxu0 0
    %1860 = vmatprep.subr.bf16.mxu0 0
    %1861 = vmatpush2.bf16.msra.mxu0 0
    %1862 = vmatprep.subr.bf16.mxu0 0
    %1863 = vmatpush2.bf16.msra.mxu0 0
    %1864 = vmatprep.mubr.bf16.mxu0 0
    %1865 = vmatmul.mubr.bf16.gmra.mxu0 %v1831
    %v1866 = vpop.f32.mrf.mxu0
    %v1867 = vadd.f32 0.0, %v1866
    %v1868 = vpop.f32.mrf.mxu0
    %v1869 = vadd.f32 0.0, %v1868
    %v1870 = vpop.f32.mrf.mxu0
    %v1871 = vpop.f32.mrf.mxu0
    %1872 = vdwg.mxu0
    %v1875 = vrot.slane %v1867, 1
    %v1876 = vrot.slane %v1869, 1
    %v1879 = vadd.f32 %v1170, %v1875
    %v1880 = vadd.f32 %v1172, %v1876
    %v1881 = vxor.u32 %v1879, 2147483648
    %v1882 = vmul.f32 %v1881, 1.442695
    %v1883 = vpow.pop %v1882
    %v1884 = vadd.f32 %v1883, 1.0
    %v1885 = vrcp.pop %v1884
    %v1886 = vmul.f32 1.0, %v1885
    %v1887 = vtanh.pop %v1880
    %v1888 = vxor.u32 %v1880, 2147483648
    %v1889 = vmul.f32 %v1888, 1.442695
    %v1890 = vpow.pop %v1889
    %v1891 = vadd.f32 %v1890, 1.0
    %v1892 = vrcp.pop %v1891
    %v1893 = vmul.f32 1.0, %v1892
    %v1895 = vrot.slane %v1886, 7
    %1897 = vrot.lane.b32.xlu0 %v1895, 64
    %v1898 = vpop.permute.xlu0 %1897
    %v1900 = vrot.slane %v1893, 7
    %1902 = vrot.lane.b32.xlu0 %v1900, 64
    %v1903 = vpop.permute.xlu0 %1902
    %v1904 = vmul.f32 %v1898, %v1827
    %v1905 = vmul.f32 %v1886, %v1887
    %v1907 = vrot.slane %v1905, 7
    %v1909 = vadd.f32 %v1904, %v1907
    %v1910 = vtanh.pop %v1909
    %v1911 = vmul.f32 %v1903, %v1910
    %v1912 = vmax.f32 %v1911, 0.0
    %v1914 = vrot.slane %v1420, 7
    %v1917 = vrot.slane %v1502, 6
    %v1920 = vrot.slane %v1584, 5
    %v1923 = vrot.slane %v1666, 4
    %v1926 = vrot.slane %v1748, 3
    %v1929 = vrot.slane %v1830, 2
    %v1932 = vrot.slane %v1912, 1
    %v1934 = vsel %vm1010, %v1338, %v1914
    %v1935 = vsel %vm1012, %v1934, %v1917
    %v1936 = vsel %vm1014, %v1935, %v1920
    %v1937 = vsel %vm1016, %v1936, %v1923
    %v1938 = vsel %vm1018, %v1937, %v1926
    %v1939 = vsel %vm1020, %v1938, %v1929
    %v1940 = vsel %vm1022, %v1939, %v1932
    %v1941 = vpack.c.bf16 %v1940, %v1940
    %v1942 = vld [vmem:[#allocation9] sm:$0xf]
    %v1943 = vld [vmem:[#allocation9 + $0x4] sm:$0xf]
    %v1944 = vld [vmem:[#allocation9 + $0x8] sm:$0xf]
    %v1945 = vld [vmem:[#allocation9 + $0xc] sm:$0xf]
    %v1946 = vld [vmem:[#allocation9 + $0x10] sm:$0xf]
    %v1947 = vld [vmem:[#allocation9 + $0x14] sm:$0xf]
    %v1948 = vld [vmem:[#allocation9 + $0x18] sm:$0xf]
    %v1949 = vld [vmem:[#allocation9 + $0x1c] sm:$0xf]
    %v1950 = vld [vmem:[#allocation9 + $0x20] sm:$0xf]
    %v1951 = vld [vmem:[#allocation9 + $0x24] sm:$0xf]
    %v1952 = vld [vmem:[#allocation9 + $0x28] sm:$0xf]
    %v1953 = vld [vmem:[#allocation9 + $0x2c] sm:$0xf]
    %v1954 = vld [vmem:[#allocation9 + $0x30] sm:$0xf]
    %v1955 = vld [vmem:[#allocation9 + $0x34] sm:$0xf]
    %v1956 = vld [vmem:[#allocation9 + $0x38] sm:$0xf]
    %v1957 = vld [vmem:[#allocation9 + $0x3c] sm:$0xf]
    %v1958 = vld [vmem:[%s8] sm:$0x1]
    %v1960 = vlaneseq
    %v1961 = vshrl.u32 %v1960, 7
    %v1962 = vsub.s32 0, %v1961
    %v1963 = vrot.slane %v1958, %v1962
    %v1981 = vunpack.c.l.b16 %v1942
    %v1982 = vunpack.c.l.b16 %v1943
    %v1983 = vunpack.c.l.b16 %v1944
    %v1984 = vunpack.c.l.b16 %v1945
    %v1985 = vunpack.c.l.b16 %v1946
    %v1986 = vunpack.c.l.b16 %v1947
    %v1987 = vunpack.c.l.b16 %v1948
    %v1988 = vunpack.c.l.b16 %v1949
    %v1989 = vunpack.c.l.b16 %v1950
    %v1990 = vunpack.c.l.b16 %v1951
    %v1991 = vunpack.c.l.b16 %v1952
    %v1992 = vunpack.c.l.b16 %v1953
    %v1993 = vunpack.c.l.b16 %v1954
    %v1994 = vunpack.c.l.b16 %v1955
    %v1995 = vunpack.c.l.b16 %v1956
    %v1996 = vunpack.c.l.b16 %v1957
    %v1997 = vpack.c.b16 %v1982, %v1981
    %v1998 = vpack.c.b16 %v1984, %v1983
    %v1999 = vpack.c.b16 %v1986, %v1985
    %v2000 = vpack.c.b16 %v1988, %v1987
    %v2001 = vpack.c.b16 %v1990, %v1989
    %v2002 = vpack.c.b16 %v1992, %v1991
    %v2003 = vpack.c.b16 %v1994, %v1993
    %v2004 = vpack.c.b16 %v1996, %v1995
    %2013 = vmatprep.subr.bf16.mxu0 0
    %2014 = vmatpush1.bf16.msra.mxu0 %v2004
    %2015 = vmatprep.subr.bf16.mxu0 0
    %2016 = vmatpush1.bf16.msra.mxu0 %v2003
    %2017 = vmatprep.subr.bf16.mxu0 0
    %2018 = vmatpush1.bf16.msra.mxu0 %v2002
    %2019 = vmatprep.subr.bf16.mxu0 0
    %2020 = vmatpush1.bf16.msra.mxu0 %v2001
    %2021 = vmatprep.subr.bf16.mxu0 0
    %2022 = vmatpush1.bf16.msra.mxu0 %v2000
    %2023 = vmatprep.subr.bf16.mxu0 0
    %2024 = vmatpush1.bf16.msra.mxu0 %v1999
    %2025 = vmatprep.subr.bf16.mxu0 0
    %2026 = vmatpush1.bf16.msra.mxu0 %v1998
    %2027 = vmatprep.subr.bf16.mxu0 0
    %2028 = vmatpush1.bf16.msra.mxu0 %v1997
    %2029 = vmatprep.subr.bf16.mxu0 0
    %2030 = vmatpush2.bf16.msra.mxu0 0
    %2031 = vmatprep.subr.bf16.mxu0 0
    %2032 = vmatpush2.bf16.msra.mxu0 0
    %2033 = vmatprep.subr.bf16.mxu0 0
    %2034 = vmatpush2.bf16.msra.mxu0 0
    %2035 = vmatprep.subr.bf16.mxu0 0
    %2036 = vmatpush2.bf16.msra.mxu0 0
    %2037 = vmatprep.subr.bf16.mxu0 0
    %2038 = vmatpush2.bf16.msra.mxu0 0
    %2039 = vmatprep.subr.bf16.mxu0 0
    %2040 = vmatpush2.bf16.msra.mxu0 0
    %2041 = vmatprep.subr.bf16.mxu0 0
    %2042 = vmatpush2.bf16.msra.mxu0 0
    %2043 = vmatprep.subr.bf16.mxu0 0
    %2044 = vmatpush2.bf16.msra.mxu0 0
    %2045 = vmatprep.mubr.bf16.mxu0 0
    %2046 = vmatmul.mubr.bf16.gmra.mxu0 %v1941
    %v2047 = vpop.f32.mrf.mxu0
    %v2048 = vadd.f32 %v1963, %v2047
    %v2049 = vpop.f32.mrf.mxu0
    %v2050 = vpop.f32.mrf.mxu0
    %v2051 = vpop.f32.mrf.mxu0
    %2052 = vdwg.mxu0
    %2053 = vst [vmem:[%s9] sm:$0xff] %v2048
    // Predicated region
    $region58: #{forward.1} parent=1 // pred_check
      _
    $region59: #{forward.1} parent=1 // pred_check_branch
      %2055 = sbr.rel (0) target = $region61
    $region60: #{forward.1} parent=1 // pred_region
      _
    $region61: #{forward.1} parent=1 // pred_fallthru
      _
    // Predicated region
    $region62: #{forward.1} parent=1 // pred_check
      _
    $region63: #{forward.1} parent=1 // pred_check_branch
      %2057 = sbr.rel (0) target = $region65
    $region64: #{forward.1} parent=1 // pred_region
      _
    $region65: #{forward.1} parent=1 // pred_fallthru
      _
    %2058 = vsyncpa [#allocation3], 1
    %2059 = vsyncpa [#allocation5], 1
    %2060 = vsyncpa [#allocation8], 1

</llo_original>
